<compile_context>
chip_gen: v7x
topology: tpu7x:2x2x1
jax: 0.10.0
libtpu: 0.0.40
codegen_flags: <defaults>
</compile_context>

<pallas_src>
import functools

import jax
import jax.numpy as jnp
from jax.experimental import pallas as pl
from jax.experimental.pallas import tpu as pltpu


def _round_up(x, m):
    return (x + m - 1) // m * m


# --------------------------------- kernel ---------------------------------------

def seq_encoder_kernel(x_ref, perm_ref, wih_ref, whh_ref, bih_ref, bhh_ref,
                       we_ref, be_ref, out_ref, *, T, BP, HP):
    """Fused SequenceEncoder forward for one batch block.

    x_ref    : (Bb*T, D)     batch-major flattened input, row = b*T + t (free reshape)
    perm_ref : (T*BP, Bb*T)  0/1 permutation: row t*BP + b  <-  input row b*T + t
    wih_ref  : (D,  3*HP)    GRU input weights, gate blocks [r|z|n] at lanes 0/HP/2HP
    whh_ref  : (HP, 3*HP)    GRU hidden weights, same gate layout, zero padded
    b*_ref   : (1,  3*HP)    GRU biases (zero in padded lanes)
    we_ref   : (T*BP, T*BP)  kron(W_att, I_BP)
    be_ref   : (T*BP, 1)     attention bias expanded per (s, b) row
    out_ref  : (BP, HP)      attention vector (padded rows/lanes sliced off outside)
    """
    # 1) time-major + 8-row-per-timestep padding via one tiny permutation matmul
    #    (replaces the host transpose; no XLU / sublane shuffles, MXU is idle anyway).
    x_tm = jnp.dot(perm_ref[...], x_ref[...], preferred_element_type=jnp.float32)

    # 2) hoisted input projection for ALL timesteps: one matmul, gates lane-padded.
    gi = jnp.dot(x_tm, wih_ref[...], preferred_element_type=jnp.float32) + bih_ref[...]

    w_hh = whh_ref[...]
    b_hh = bhh_ref[...]

    # 3) GRU recurrence (PyTorch gate order r, z, n; zero initial state).  T is small
    #    and static -> fully unrolled; every slice is 8-sublane / 128-lane aligned.
    # NOTE: w_hh is loop-invariant; pltpu.matmul_push_rhs could pin it in the MXU
    # weight registers across the recurrence — kept as jnp.dot for portability.
    h = jnp.zeros((BP, HP), jnp.float32)
    hs = []
    for t in range(T):
        gi_t = gi[t * BP:(t + 1) * BP, :]                                    # (BP, 3HP)
        gh = jnp.dot(h, w_hh, preferred_element_type=jnp.float32) + b_hh     # (BP, 3HP)
        r = jax.nn.sigmoid(gi_t[:, 0 * HP:1 * HP] + gh[:, 0 * HP:1 * HP])
        z = jax.nn.sigmoid(gi_t[:, 1 * HP:2 * HP] + gh[:, 1 * HP:2 * HP])
        n = jnp.tanh(gi_t[:, 2 * HP:3 * HP] + r * gh[:, 2 * HP:3 * HP])
        h = (1.0 - z) * n + z * h
        hs.append(h)

    # TODO(synk): nn.Dropout(0.2) is identity in eval mode (implemented here); training
    # mode would need pltpu.prng_seed / prng_random_bits masking.

    # 4) AttentionBlock over time — one matmul on the natural (t, b)-stacked layout.
    hstack = jnp.concatenate(hs, axis=0)                                     # (T*BP, HP)
    aw = jnp.dot(we_ref[...], hstack,
                 preferred_element_type=jnp.float32) + be_ref[...]           # (T*BP, HP)
    aw3 = aw.reshape(T, BP, HP)          # free: splits the sublane-tiled leading dim
    h3 = hstack.reshape(T, BP, HP)
    m = jnp.max(aw3, axis=0, keepdims=True)
    e = jnp.exp(aw3 - m)
    denom = jnp.sum(e, axis=0, keepdims=True)
    probs = e * pl.reciprocal(denom, approx=False)       # exact: probs sum to 1
    out_ref[...] = jnp.sum(probs * h3, axis=0)                               # (BP, HP)


# --------------------------------- wrapper --------------------------------------

def sequence_encoder_forward(seq, kp):
    """SequenceEncoder.forward: seq (batch, time_step, input_dim) -> (batch, 1, hidden)."""
    B, T, D = seq.shape
    HP = kp['w_hh'].shape[0]
    TBP, BbT = kp['perm'].shape
    BP = TBP // T                      # rows per timestep (batch block padded to 8)
    Bb = BbT // T                      # batch block size
    H = kp['hidden_dim']
    assert B % Bb == 0, "batch must be a multiple of the batch block"
    nb = B // Bb

    x2 = seq.reshape(B * T, D)         # free reshape (row = b*T + t); NO host transpose

    kernel = functools.partial(seq_encoder_kernel, T=T, BP=BP, HP=HP)
    out = pl.pallas_call(
        kernel,
        out_shape=jax.ShapeDtypeStruct((nb * BP, HP), jnp.float32),
        grid=(nb,),
        in_specs=[
            pl.BlockSpec((Bb * T, D), lambda i: (i, 0)),       # x: batch-blocked
            pl.BlockSpec((T * BP, Bb * T), lambda i: (0, 0)),  # permutation matrix
            pl.BlockSpec((D, 3 * HP), lambda i: (0, 0)),       # w_ih (gate-padded)
            pl.BlockSpec((HP, 3 * HP), lambda i: (0, 0)),      # w_hh (gate-padded)
            pl.BlockSpec((1, 3 * HP), lambda i: (0, 0)),       # b_ih
            pl.BlockSpec((1, 3 * HP), lambda i: (0, 0)),       # b_hh
            pl.BlockSpec((T * BP, T * BP), lambda i: (0, 0)),  # kron attention weight
            pl.BlockSpec((T * BP, 1), lambda i: (0, 0)),       # expanded attention bias
        ],
        out_specs=pl.BlockSpec((BP, HP), lambda i: (i, 0)),
        compiler_params=pltpu.CompilerParams(
            dimension_semantics=("parallel",)),                # batch blocks -> both TCs on v7x
    )(x2, kp['perm'], kp['w_ih'], kp['w_hh'], kp['b_ih'], kp['b_hh'],
      kp['att_we'], kp['att_be'])

    att = out.reshape(nb, BP, HP)[:, :Bb, :H]                  # drop padded rows / lanes
    return att.reshape(B, 1, H)                                # .view(-1, 1, dim)


# ----------------------------- parameters ---------------------------------------

def init_torch_params(key, input_dim, time_step, hidden_dim):
    """PyTorch-layout parameters with torch-style uniform init."""
    D, T, H = input_dim, time_step, hidden_dim
    ks = jax.random.split(key, 6)
    s_h = H ** -0.5
    s_t = T ** -0.5
    return {
        'w_ih': jax.random.uniform(ks[0], (3 * H, D), jnp.float32, -s_h, s_h),  # (3H, D)
        'w_hh': jax.random.uniform(ks[1], (3 * H, H), jnp.float32, -s_h, s_h),  # (3H, H)
        'b_ih': jax.random.uniform(ks[2], (3 * H,), jnp.float32, -s_h, s_h),
        'b_hh': jax.random.uniform(ks[3], (3 * H,), jnp.float32, -s_h, s_h),
        'att_w': jax.random.uniform(ks[4], (T, T), jnp.float32, -s_t, s_t),
        'att_b': jax.random.uniform(ks[5], (T,), jnp.float32, -s_t, s_t),
    }


def pack_params(tp, *, time_step, batch_block):
    """Re-pack torch-layout params into the kernel's padded, lane-aligned layout."""
    T = time_step
    Bb = batch_block
    BP = _round_up(Bb, 8)                         # rows per timestep, sublane aligned
    H = tp['w_hh'].shape[1]
    D = tp['w_ih'].shape[1]
    HP = _round_up(H, 128)                        # gate block width (full 128-lane blocks)

    def pad_gate_cols(w_t):                       # torch (3H, K) -> (K, 3*HP)
        w = jnp.transpose(w_t)                    # (K, 3H), gate blocks [r|z|n]
        out = jnp.zeros((w.shape[0], 3 * HP), jnp.float32)
        for g in range(3):
            out = out.at[:, g * HP:g * HP + H].set(w[:, g * H:(g + 1) * H])
        return out

    def pad_gate_bias(b):
        out = jnp.zeros((1, 3 * HP), jnp.float32)
        for g in range(3):
            out = out.at[0, g * HP:g * HP + H].set(b[g * H:(g + 1) * H])
        return out

    w_ih = pad_gate_cols(tp['w_ih'])                                          # (D, 3HP)
    w_hh = jnp.zeros((HP, 3 * HP), jnp.float32).at[:H, :].set(
        pad_gate_cols(tp['w_hh']))                                            # (HP, 3HP)
    b_ih = pad_gate_bias(tp['b_ih'])
    b_hh = pad_gate_bias(tp['b_hh'])

    # permutation: row t*BP + b  <-  input row b*T + t  (b < Bb), padded rows all zero
    perm = jnp.zeros((T * BP, Bb * T), jnp.float32)
    rows = (jnp.arange(T)[:, None] * BP + jnp.arange(Bb)[None, :]).reshape(-1)
    cols = (jnp.arange(Bb)[None, :] * T + jnp.arange(T)[:, None]).reshape(-1)
    perm = perm.at[rows, cols].set(1.0)

    # attention: WE[s*BP+b, t*BP+b'] = W_att[s,t] * (b == b');  be[s*BP+b] = b_att[s]
    att_we = jnp.kron(tp['att_w'], jnp.eye(BP, dtype=jnp.float32))            # (T*BP, T*BP)
    att_be = jnp.repeat(tp['att_b'], BP).reshape(T * BP, 1)

    return {'w_ih': w_ih, 'w_hh': w_hh, 'b_ih': b_ih, 'b_hh': b_hh,
            'perm': perm, 'att_we': att_we, 'att_be': att_be,
            'hidden_dim': int(H)}


# ------------------------------ pure-jnp reference -------------------------------

def reference_forward(seq, tp):
    """Pure-jnp mirror of the PyTorch module (correctness check), torch-layout params."""
    B, T, D = seq.shape
    H = tp['w_hh'].shape[1]
    w_ih, w_hh = jnp.transpose(tp['w_ih']), jnp.transpose(tp['w_hh'])
    b_ih, b_hh = tp['b_ih'], tp['b_hh']
    h = jnp.zeros((B, H), jnp.float32)
    hs = []
    for t in range(T):
        gi = seq[:, t, :] @ w_ih + b_ih
        gh = h @ w_hh + b_hh
        r = jax.nn.sigmoid(gi[:, :H] + gh[:, :H])
        z = jax.nn.sigmoid(gi[:, H:2 * H] + gh[:, H:2 * H])
        n = jnp.tanh(gi[:, 2 * H:] + r * gh[:, 2 * H:])
        h = (1.0 - z) * n + z * h
        hs.append(h)
    hseq = jnp.stack(hs, axis=1)                                             # (B, T, H)
    inputs_t = jnp.transpose(hseq, (0, 2, 1))                                # (B, H, T)
    aw = inputs_t @ tp['att_w'].T + tp['att_b']                              # (B, H, T)
    probs = jax.nn.softmax(aw, axis=-1)
    probs_t = jnp.transpose(probs, (0, 2, 1))                                # (B, T, H)
    att = jnp.sum(probs_t * hseq, axis=1)                                    # (B, H)
    return att.reshape(B, 1, H)


# ----------------------------------- main ----------------------------------------

if __name__ == "__main__":
    BATCH, TIME_STEP, INPUT_DIM, HIDDEN = 4, 8, 8, 32

    key = jax.random.PRNGKey(0)
    pkey, xkey = jax.random.split(key)
    tparams = init_torch_params(pkey, INPUT_DIM, TIME_STEP, HIDDEN)
    kparams = pack_params(tparams, time_step=TIME_STEP, batch_block=BATCH)
    seq = jax.random.normal(xkey, (BATCH, TIME_STEP, INPUT_DIM), jnp.float32)

    out = sequence_encoder_forward(seq, kparams)
    out = jax.block_until_ready(out)

    assert out.shape == (BATCH, 1, HIDDEN)
    assert bool(jnp.all(jnp.isfinite(out)))

    ref = reference_forward(seq, tparams)
    max_err = float(jnp.max(jnp.abs(out - ref)))
    assert max_err < 1e-3, f"mismatch vs reference: {max_err}"

    print("KERNEL_OK")
</pallas_src>

<mosaic_0001>
module attributes {stable_mosaic.version = 11 : i64} {
  func.func @seq_encoder_kernel(%arg0: i32, %arg1: memref<32x8xf32, #tpu.memory_space<vmem>>, %arg2: memref<64x32xf32, #tpu.memory_space<vmem>>, %arg3: memref<8x384xf32, #tpu.memory_space<vmem>>, %arg4: memref<128x384xf32, #tpu.memory_space<vmem>>, %arg5: memref<1x384xf32, #tpu.memory_space<vmem>>, %arg6: memref<1x384xf32, #tpu.memory_space<vmem>>, %arg7: memref<64x64xf32, #tpu.memory_space<vmem>>, %arg8: memref<64x1xf32, #tpu.memory_space<vmem>>, %arg9: memref<8x128xf32, #tpu.memory_space<vmem>>) attributes {dimension_semantics = [#tpu.dimension_semantics<parallel>], iteration_bounds = array<i64: 1>, scalar_prefetch = 0 : i64, scratch_operands = 0 : i64, tpu.core_type = #tpu.core_type<tc>, window_params = [{transform_indices = @transform_0, window_bounds = array<i64: 32, 8>}, {pipeline_mode = #tpu.pipeline_mode<synchronous>, transform_indices = @transform_1, window_bounds = array<i64: 64, 32>}, {pipeline_mode = #tpu.pipeline_mode<synchronous>, transform_indices = @transform_2, window_bounds = array<i64: 8, 384>}, {pipeline_mode = #tpu.pipeline_mode<synchronous>, transform_indices = @transform_3, window_bounds = array<i64: 128, 384>}, {pipeline_mode = #tpu.pipeline_mode<synchronous>, transform_indices = @transform_4, window_bounds = array<i64: 1, 384>}, {pipeline_mode = #tpu.pipeline_mode<synchronous>, transform_indices = @transform_5, window_bounds = array<i64: 1, 384>}, {pipeline_mode = #tpu.pipeline_mode<synchronous>, transform_indices = @transform_6, window_bounds = array<i64: 64, 64>}, {pipeline_mode = #tpu.pipeline_mode<synchronous>, transform_indices = @transform_7, window_bounds = array<i64: 64, 1>}, {transform_indices = @transform_8, window_bounds = array<i64: 8, 128>}]} {
    %c0 = arith.constant 0 : index
    %c0_0 = arith.constant 0 : index
    %0 = vector.load %arg2[%c0, %c0_0] : memref<64x32xf32, #tpu.memory_space<vmem>>, vector<64x32xf32>
    %c0_1 = arith.constant 0 : index
    %c0_2 = arith.constant 0 : index
    %1 = vector.load %arg1[%c0_1, %c0_2] : memref<32x8xf32, #tpu.memory_space<vmem>>, vector<32x8xf32>
    %cst = arith.constant dense<0.000000e+00> : vector<64x8xf32>
    %2 = tpu.matmul %0, %1, %cst {dimension_numbers = #tpu.dot_dimension_numbers<[1], [0], [0], [1], [0, 0, 1, 1], [], []>} : vector<64x32xf32>, vector<32x8xf32>, vector<64x8xf32> -> vector<64x8xf32>
    %c0_3 = arith.constant 0 : index
    %c0_4 = arith.constant 0 : index
    %3 = vector.load %arg3[%c0_3, %c0_4] : memref<8x384xf32, #tpu.memory_space<vmem>>, vector<8x384xf32>
    %cst_5 = arith.constant dense<0.000000e+00> : vector<64x384xf32>
    %4 = tpu.matmul %2, %3, %cst_5 {dimension_numbers = #tpu.dot_dimension_numbers<[1], [0], [0], [1], [0, 0, 1, 1], [], []>} : vector<64x8xf32>, vector<8x384xf32>, vector<64x384xf32> -> vector<64x384xf32>
    %c0_6 = arith.constant 0 : index
    %c0_7 = arith.constant 0 : index
    %5 = vector.load %arg5[%c0_6, %c0_7] : memref<1x384xf32, #tpu.memory_space<vmem>>, vector<1x384xf32>
    %6 = vector.broadcast %5 : vector<1x384xf32> to vector<64x384xf32>
    %7 = arith.addf %4, %6 : vector<64x384xf32>
    %c0_8 = arith.constant 0 : index
    %c0_9 = arith.constant 0 : index
    %8 = vector.load %arg4[%c0_8, %c0_9] : memref<128x384xf32, #tpu.memory_space<vmem>>, vector<128x384xf32>
    %c0_10 = arith.constant 0 : index
    %c0_11 = arith.constant 0 : index
    %9 = vector.load %arg6[%c0_10, %c0_11] : memref<1x384xf32, #tpu.memory_space<vmem>>, vector<1x384xf32>
    %cst_12 = arith.constant 0.000000e+00 : f32
    %10 = vector.broadcast %cst_12 : f32 to vector<8x128xf32>
    %11 = vector.extract_strided_slice %7 {offsets = [0, 0], sizes = [8, 384], strides = [1, 1]} : vector<64x384xf32> to vector<8x384xf32>
    %cst_13 = arith.constant dense<0.000000e+00> : vector<8x384xf32>
    %12 = tpu.matmul %10, %8, %cst_13 {dimension_numbers = #tpu.dot_dimension_numbers<[1], [0], [0], [1], [0, 0, 1, 1], [], []>} : vector<8x128xf32>, vector<128x384xf32>, vector<8x384xf32> -> vector<8x384xf32>
    %13 = vector.broadcast %9 : vector<1x384xf32> to vector<8x384xf32>
    %14 = arith.addf %12, %13 : vector<8x384xf32>
    %15 = vector.extract_strided_slice %11 {offsets = [0, 0], sizes = [8, 128], strides = [1, 1]} : vector<8x384xf32> to vector<8x128xf32>
    %16 = vector.extract_strided_slice %14 {offsets = [0, 0], sizes = [8, 128], strides = [1, 1]} : vector<8x384xf32> to vector<8x128xf32>
    %17 = arith.addf %15, %16 : vector<8x128xf32>
    %18 = arith.negf %17 : vector<8x128xf32>
    %19 = math.exp %18 : vector<8x128xf32>
    %cst_14 = arith.constant 1.000000e+00 : f32
    %20 = vector.broadcast %cst_14 : f32 to vector<8x128xf32>
    %21 = arith.addf %20, %19 : vector<8x128xf32>
    %22 = arith.divf %20, %21 : vector<8x128xf32>
    %23 = vector.extract_strided_slice %11 {offsets = [0, 128], sizes = [8, 128], strides = [1, 1]} : vector<8x384xf32> to vector<8x128xf32>
    %24 = vector.extract_strided_slice %14 {offsets = [0, 128], sizes = [8, 128], strides = [1, 1]} : vector<8x384xf32> to vector<8x128xf32>
    %25 = arith.addf %23, %24 : vector<8x128xf32>
    %26 = arith.negf %25 : vector<8x128xf32>
    %27 = math.exp %26 : vector<8x128xf32>
    %cst_15 = arith.constant 1.000000e+00 : f32
    %28 = vector.broadcast %cst_15 : f32 to vector<8x128xf32>
    %29 = arith.addf %28, %27 : vector<8x128xf32>
    %30 = arith.divf %28, %29 : vector<8x128xf32>
    %31 = vector.extract_strided_slice %11 {offsets = [0, 256], sizes = [8, 128], strides = [1, 1]} : vector<8x384xf32> to vector<8x128xf32>
    %32 = vector.extract_strided_slice %14 {offsets = [0, 256], sizes = [8, 128], strides = [1, 1]} : vector<8x384xf32> to vector<8x128xf32>
    %33 = arith.mulf %22, %32 : vector<8x128xf32>
    %34 = arith.addf %31, %33 : vector<8x128xf32>
    %35 = math.tanh %34 : vector<8x128xf32>
    %cst_16 = arith.constant 1.000000e+00 : f32
    %36 = vector.broadcast %cst_16 : f32 to vector<8x128xf32>
    %37 = arith.subf %36, %30 : vector<8x128xf32>
    %38 = arith.mulf %37, %35 : vector<8x128xf32>
    %39 = arith.mulf %30, %10 : vector<8x128xf32>
    %40 = arith.addf %38, %39 : vector<8x128xf32>
    %41 = vector.extract_strided_slice %7 {offsets = [8, 0], sizes = [8, 384], strides = [1, 1]} : vector<64x384xf32> to vector<8x384xf32>
    %cst_17 = arith.constant dense<0.000000e+00> : vector<8x384xf32>
    %42 = tpu.matmul %40, %8, %cst_17 {dimension_numbers = #tpu.dot_dimension_numbers<[1], [0], [0], [1], [0, 0, 1, 1], [], []>} : vector<8x128xf32>, vector<128x384xf32>, vector<8x384xf32> -> vector<8x384xf32>
    %43 = vector.broadcast %9 : vector<1x384xf32> to vector<8x384xf32>
    %44 = arith.addf %42, %43 : vector<8x384xf32>
    %45 = vector.extract_strided_slice %41 {offsets = [0, 0], sizes = [8, 128], strides = [1, 1]} : vector<8x384xf32> to vector<8x128xf32>
    %46 = vector.extract_strided_slice %44 {offsets = [0, 0], sizes = [8, 128], strides = [1, 1]} : vector<8x384xf32> to vector<8x128xf32>
    %47 = arith.addf %45, %46 : vector<8x128xf32>
    %48 = arith.negf %47 : vector<8x128xf32>
    %49 = math.exp %48 : vector<8x128xf32>
    %cst_18 = arith.constant 1.000000e+00 : f32
    %50 = vector.broadcast %cst_18 : f32 to vector<8x128xf32>
    %51 = arith.addf %50, %49 : vector<8x128xf32>
    %52 = arith.divf %50, %51 : vector<8x128xf32>
    %53 = vector.extract_strided_slice %41 {offsets = [0, 128], sizes = [8, 128], strides = [1, 1]} : vector<8x384xf32> to vector<8x128xf32>
    %54 = vector.extract_strided_slice %44 {offsets = [0, 128], sizes = [8, 128], strides = [1, 1]} : vector<8x384xf32> to vector<8x128xf32>
    %55 = arith.addf %53, %54 : vector<8x128xf32>
    %56 = arith.negf %55 : vector<8x128xf32>
    %57 = math.exp %56 : vector<8x128xf32>
    %cst_19 = arith.constant 1.000000e+00 : f32
    %58 = vector.broadcast %cst_19 : f32 to vector<8x128xf32>
    %59 = arith.addf %58, %57 : vector<8x128xf32>
    %60 = arith.divf %58, %59 : vector<8x128xf32>
    %61 = vector.extract_strided_slice %41 {offsets = [0, 256], sizes = [8, 128], strides = [1, 1]} : vector<8x384xf32> to vector<8x128xf32>
    %62 = vector.extract_strided_slice %44 {offsets = [0, 256], sizes = [8, 128], strides = [1, 1]} : vector<8x384xf32> to vector<8x128xf32>
    %63 = arith.mulf %52, %62 : vector<8x128xf32>
    %64 = arith.addf %61, %63 : vector<8x128xf32>
    %65 = math.tanh %64 : vector<8x128xf32>
    %cst_20 = arith.constant 1.000000e+00 : f32
    %66 = vector.broadcast %cst_20 : f32 to vector<8x128xf32>
    %67 = arith.subf %66, %60 : vector<8x128xf32>
    %68 = arith.mulf %67, %65 : vector<8x128xf32>
    %69 = arith.mulf %60, %40 : vector<8x128xf32>
    %70 = arith.addf %68, %69 : vector<8x128xf32>
    %71 = vector.extract_strided_slice %7 {offsets = [16, 0], sizes = [8, 384], strides = [1, 1]} : vector<64x384xf32> to vector<8x384xf32>
    %cst_21 = arith.constant dense<0.000000e+00> : vector<8x384xf32>
    %72 = tpu.matmul %70, %8, %cst_21 {dimension_numbers = #tpu.dot_dimension_numbers<[1], [0], [0], [1], [0, 0, 1, 1], [], []>} : vector<8x128xf32>, vector<128x384xf32>, vector<8x384xf32> -> vector<8x384xf32>
    %73 = vector.broadcast %9 : vector<1x384xf32> to vector<8x384xf32>
    %74 = arith.addf %72, %73 : vector<8x384xf32>
    %75 = vector.extract_strided_slice %71 {offsets = [0, 0], sizes = [8, 128], strides = [1, 1]} : vector<8x384xf32> to vector<8x128xf32>
    %76 = vector.extract_strided_slice %74 {offsets = [0, 0], sizes = [8, 128], strides = [1, 1]} : vector<8x384xf32> to vector<8x128xf32>
    %77 = arith.addf %75, %76 : vector<8x128xf32>
    %78 = arith.negf %77 : vector<8x128xf32>
    %79 = math.exp %78 : vector<8x128xf32>
    %cst_22 = arith.constant 1.000000e+00 : f32
    %80 = vector.broadcast %cst_22 : f32 to vector<8x128xf32>
    %81 = arith.addf %80, %79 : vector<8x128xf32>
    %82 = arith.divf %80, %81 : vector<8x128xf32>
    %83 = vector.extract_strided_slice %71 {offsets = [0, 128], sizes = [8, 128], strides = [1, 1]} : vector<8x384xf32> to vector<8x128xf32>
    %84 = vector.extract_strided_slice %74 {offsets = [0, 128], sizes = [8, 128], strides = [1, 1]} : vector<8x384xf32> to vector<8x128xf32>
    %85 = arith.addf %83, %84 : vector<8x128xf32>
    %86 = arith.negf %85 : vector<8x128xf32>
    %87 = math.exp %86 : vector<8x128xf32>
    %cst_23 = arith.constant 1.000000e+00 : f32
    %88 = vector.broadcast %cst_23 : f32 to vector<8x128xf32>
    %89 = arith.addf %88, %87 : vector<8x128xf32>
    %90 = arith.divf %88, %89 : vector<8x128xf32>
    %91 = vector.extract_strided_slice %71 {offsets = [0, 256], sizes = [8, 128], strides = [1, 1]} : vector<8x384xf32> to vector<8x128xf32>
    %92 = vector.extract_strided_slice %74 {offsets = [0, 256], sizes = [8, 128], strides = [1, 1]} : vector<8x384xf32> to vector<8x128xf32>
    %93 = arith.mulf %82, %92 : vector<8x128xf32>
    %94 = arith.addf %91, %93 : vector<8x128xf32>
    %95 = math.tanh %94 : vector<8x128xf32>
    %cst_24 = arith.constant 1.000000e+00 : f32
    %96 = vector.broadcast %cst_24 : f32 to vector<8x128xf32>
    %97 = arith.subf %96, %90 : vector<8x128xf32>
    %98 = arith.mulf %97, %95 : vector<8x128xf32>
    %99 = arith.mulf %90, %70 : vector<8x128xf32>
    %100 = arith.addf %98, %99 : vector<8x128xf32>
    %101 = vector.extract_strided_slice %7 {offsets = [24, 0], sizes = [8, 384], strides = [1, 1]} : vector<64x384xf32> to vector<8x384xf32>
    %cst_25 = arith.constant dense<0.000000e+00> : vector<8x384xf32>
    %102 = tpu.matmul %100, %8, %cst_25 {dimension_numbers = #tpu.dot_dimension_numbers<[1], [0], [0], [1], [0, 0, 1, 1], [], []>} : vector<8x128xf32>, vector<128x384xf32>, vector<8x384xf32> -> vector<8x384xf32>
    %103 = vector.broadcast %9 : vector<1x384xf32> to vector<8x384xf32>
    %104 = arith.addf %102, %103 : vector<8x384xf32>
    %105 = vector.extract_strided_slice %101 {offsets = [0, 0], sizes = [8, 128], strides = [1, 1]} : vector<8x384xf32> to vector<8x128xf32>
    %106 = vector.extract_strided_slice %104 {offsets = [0, 0], sizes = [8, 128], strides = [1, 1]} : vector<8x384xf32> to vector<8x128xf32>
    %107 = arith.addf %105, %106 : vector<8x128xf32>
    %108 = arith.negf %107 : vector<8x128xf32>
    %109 = math.exp %108 : vector<8x128xf32>
    %cst_26 = arith.constant 1.000000e+00 : f32
    %110 = vector.broadcast %cst_26 : f32 to vector<8x128xf32>
    %111 = arith.addf %110, %109 : vector<8x128xf32>
    %112 = arith.divf %110, %111 : vector<8x128xf32>
    %113 = vector.extract_strided_slice %101 {offsets = [0, 128], sizes = [8, 128], strides = [1, 1]} : vector<8x384xf32> to vector<8x128xf32>
    %114 = vector.extract_strided_slice %104 {offsets = [0, 128], sizes = [8, 128], strides = [1, 1]} : vector<8x384xf32> to vector<8x128xf32>
    %115 = arith.addf %113, %114 : vector<8x128xf32>
    %116 = arith.negf %115 : vector<8x128xf32>
    %117 = math.exp %116 : vector<8x128xf32>
    %cst_27 = arith.constant 1.000000e+00 : f32
    %118 = vector.broadcast %cst_27 : f32 to vector<8x128xf32>
    %119 = arith.addf %118, %117 : vector<8x128xf32>
    %120 = arith.divf %118, %119 : vector<8x128xf32>
    %121 = vector.extract_strided_slice %101 {offsets = [0, 256], sizes = [8, 128], strides = [1, 1]} : vector<8x384xf32> to vector<8x128xf32>
    %122 = vector.extract_strided_slice %104 {offsets = [0, 256], sizes = [8, 128], strides = [1, 1]} : vector<8x384xf32> to vector<8x128xf32>
    %123 = arith.mulf %112, %122 : vector<8x128xf32>
    %124 = arith.addf %121, %123 : vector<8x128xf32>
    %125 = math.tanh %124 : vector<8x128xf32>
    %cst_28 = arith.constant 1.000000e+00 : f32
    %126 = vector.broadcast %cst_28 : f32 to vector<8x128xf32>
    %127 = arith.subf %126, %120 : vector<8x128xf32>
    %128 = arith.mulf %127, %125 : vector<8x128xf32>
    %129 = arith.mulf %120, %100 : vector<8x128xf32>
    %130 = arith.addf %128, %129 : vector<8x128xf32>
    %131 = vector.extract_strided_slice %7 {offsets = [32, 0], sizes = [8, 384], strides = [1, 1]} : vector<64x384xf32> to vector<8x384xf32>
    %cst_29 = arith.constant dense<0.000000e+00> : vector<8x384xf32>
    %132 = tpu.matmul %130, %8, %cst_29 {dimension_numbers = #tpu.dot_dimension_numbers<[1], [0], [0], [1], [0, 0, 1, 1], [], []>} : vector<8x128xf32>, vector<128x384xf32>, vector<8x384xf32> -> vector<8x384xf32>
    %133 = vector.broadcast %9 : vector<1x384xf32> to vector<8x384xf32>
    %134 = arith.addf %132, %133 : vector<8x384xf32>
    %135 = vector.extract_strided_slice %131 {offsets = [0, 0], sizes = [8, 128], strides = [1, 1]} : vector<8x384xf32> to vector<8x128xf32>
    %136 = vector.extract_strided_slice %134 {offsets = [0, 0], sizes = [8, 128], strides = [1, 1]} : vector<8x384xf32> to vector<8x128xf32>
    %137 = arith.addf %135, %136 : vector<8x128xf32>
    %138 = arith.negf %137 : vector<8x128xf32>
    %139 = math.exp %138 : vector<8x128xf32>
    %cst_30 = arith.constant 1.000000e+00 : f32
    %140 = vector.broadcast %cst_30 : f32 to vector<8x128xf32>
    %141 = arith.addf %140, %139 : vector<8x128xf32>
    %142 = arith.divf %140, %141 : vector<8x128xf32>
    %143 = vector.extract_strided_slice %131 {offsets = [0, 128], sizes = [8, 128], strides = [1, 1]} : vector<8x384xf32> to vector<8x128xf32>
    %144 = vector.extract_strided_slice %134 {offsets = [0, 128], sizes = [8, 128], strides = [1, 1]} : vector<8x384xf32> to vector<8x128xf32>
    %145 = arith.addf %143, %144 : vector<8x128xf32>
    %146 = arith.negf %145 : vector<8x128xf32>
    %147 = math.exp %146 : vector<8x128xf32>
    %cst_31 = arith.constant 1.000000e+00 : f32
    %148 = vector.broadcast %cst_31 : f32 to vector<8x128xf32>
    %149 = arith.addf %148, %147 : vector<8x128xf32>
    %150 = arith.divf %148, %149 : vector<8x128xf32>
    %151 = vector.extract_strided_slice %131 {offsets = [0, 256], sizes = [8, 128], strides = [1, 1]} : vector<8x384xf32> to vector<8x128xf32>
    %152 = vector.extract_strided_slice %134 {offsets = [0, 256], sizes = [8, 128], strides = [1, 1]} : vector<8x384xf32> to vector<8x128xf32>
    %153 = arith.mulf %142, %152 : vector<8x128xf32>
    %154 = arith.addf %151, %153 : vector<8x128xf32>
    %155 = math.tanh %154 : vector<8x128xf32>
    %cst_32 = arith.constant 1.000000e+00 : f32
    %156 = vector.broadcast %cst_32 : f32 to vector<8x128xf32>
    %157 = arith.subf %156, %150 : vector<8x128xf32>
    %158 = arith.mulf %157, %155 : vector<8x128xf32>
    %159 = arith.mulf %150, %130 : vector<8x128xf32>
    %160 = arith.addf %158, %159 : vector<8x128xf32>
    %161 = vector.extract_strided_slice %7 {offsets = [40, 0], sizes = [8, 384], strides = [1, 1]} : vector<64x384xf32> to vector<8x384xf32>
    %cst_33 = arith.constant dense<0.000000e+00> : vector<8x384xf32>
    %162 = tpu.matmul %160, %8, %cst_33 {dimension_numbers = #tpu.dot_dimension_numbers<[1], [0], [0], [1], [0, 0, 1, 1], [], []>} : vector<8x128xf32>, vector<128x384xf32>, vector<8x384xf32> -> vector<8x384xf32>
    %163 = vector.broadcast %9 : vector<1x384xf32> to vector<8x384xf32>
    %164 = arith.addf %162, %163 : vector<8x384xf32>
    %165 = vector.extract_strided_slice %161 {offsets = [0, 0], sizes = [8, 128], strides = [1, 1]} : vector<8x384xf32> to vector<8x128xf32>
    %166 = vector.extract_strided_slice %164 {offsets = [0, 0], sizes = [8, 128], strides = [1, 1]} : vector<8x384xf32> to vector<8x128xf32>
    %167 = arith.addf %165, %166 : vector<8x128xf32>
    %168 = arith.negf %167 : vector<8x128xf32>
    %169 = math.exp %168 : vector<8x128xf32>
    %cst_34 = arith.constant 1.000000e+00 : f32
    %170 = vector.broadcast %cst_34 : f32 to vector<8x128xf32>
    %171 = arith.addf %170, %169 : vector<8x128xf32>
    %172 = arith.divf %170, %171 : vector<8x128xf32>
    %173 = vector.extract_strided_slice %161 {offsets = [0, 128], sizes = [8, 128], strides = [1, 1]} : vector<8x384xf32> to vector<8x128xf32>
    %174 = vector.extract_strided_slice %164 {offsets = [0, 128], sizes = [8, 128], strides = [1, 1]} : vector<8x384xf32> to vector<8x128xf32>
    %175 = arith.addf %173, %174 : vector<8x128xf32>
    %176 = arith.negf %175 : vector<8x128xf32>
    %177 = math.exp %176 : vector<8x128xf32>
    %cst_35 = arith.constant 1.000000e+00 : f32
    %178 = vector.broadcast %cst_35 : f32 to vector<8x128xf32>
    %179 = arith.addf %178, %177 : vector<8x128xf32>
    %180 = arith.divf %178, %179 : vector<8x128xf32>
    %181 = vector.extract_strided_slice %161 {offsets = [0, 256], sizes = [8, 128], strides = [1, 1]} : vector<8x384xf32> to vector<8x128xf32>
    %182 = vector.extract_strided_slice %164 {offsets = [0, 256], sizes = [8, 128], strides = [1, 1]} : vector<8x384xf32> to vector<8x128xf32>
    %183 = arith.mulf %172, %182 : vector<8x128xf32>
    %184 = arith.addf %181, %183 : vector<8x128xf32>
    %185 = math.tanh %184 : vector<8x128xf32>
    %cst_36 = arith.constant 1.000000e+00 : f32
    %186 = vector.broadcast %cst_36 : f32 to vector<8x128xf32>
    %187 = arith.subf %186, %180 : vector<8x128xf32>
    %188 = arith.mulf %187, %185 : vector<8x128xf32>
    %189 = arith.mulf %180, %160 : vector<8x128xf32>
    %190 = arith.addf %188, %189 : vector<8x128xf32>
    %191 = vector.extract_strided_slice %7 {offsets = [48, 0], sizes = [8, 384], strides = [1, 1]} : vector<64x384xf32> to vector<8x384xf32>
    %cst_37 = arith.constant dense<0.000000e+00> : vector<8x384xf32>
    %192 = tpu.matmul %190, %8, %cst_37 {dimension_numbers = #tpu.dot_dimension_numbers<[1], [0], [0], [1], [0, 0, 1, 1], [], []>} : vector<8x128xf32>, vector<128x384xf32>, vector<8x384xf32> -> vector<8x384xf32>
    %193 = vector.broadcast %9 : vector<1x384xf32> to vector<8x384xf32>
    %194 = arith.addf %192, %193 : vector<8x384xf32>
    %195 = vector.extract_strided_slice %191 {offsets = [0, 0], sizes = [8, 128], strides = [1, 1]} : vector<8x384xf32> to vector<8x128xf32>
    %196 = vector.extract_strided_slice %194 {offsets = [0, 0], sizes = [8, 128], strides = [1, 1]} : vector<8x384xf32> to vector<8x128xf32>
    %197 = arith.addf %195, %196 : vector<8x128xf32>
    %198 = arith.negf %197 : vector<8x128xf32>
    %199 = math.exp %198 : vector<8x128xf32>
    %cst_38 = arith.constant 1.000000e+00 : f32
    %200 = vector.broadcast %cst_38 : f32 to vector<8x128xf32>
    %201 = arith.addf %200, %199 : vector<8x128xf32>
    %202 = arith.divf %200, %201 : vector<8x128xf32>
    %203 = vector.extract_strided_slice %191 {offsets = [0, 128], sizes = [8, 128], strides = [1, 1]} : vector<8x384xf32> to vector<8x128xf32>
    %204 = vector.extract_strided_slice %194 {offsets = [0, 128], sizes = [8, 128], strides = [1, 1]} : vector<8x384xf32> to vector<8x128xf32>
    %205 = arith.addf %203, %204 : vector<8x128xf32>
    %206 = arith.negf %205 : vector<8x128xf32>
    %207 = math.exp %206 : vector<8x128xf32>
    %cst_39 = arith.constant 1.000000e+00 : f32
    %208 = vector.broadcast %cst_39 : f32 to vector<8x128xf32>
    %209 = arith.addf %208, %207 : vector<8x128xf32>
    %210 = arith.divf %208, %209 : vector<8x128xf32>
    %211 = vector.extract_strided_slice %191 {offsets = [0, 256], sizes = [8, 128], strides = [1, 1]} : vector<8x384xf32> to vector<8x128xf32>
    %212 = vector.extract_strided_slice %194 {offsets = [0, 256], sizes = [8, 128], strides = [1, 1]} : vector<8x384xf32> to vector<8x128xf32>
    %213 = arith.mulf %202, %212 : vector<8x128xf32>
    %214 = arith.addf %211, %213 : vector<8x128xf32>
    %215 = math.tanh %214 : vector<8x128xf32>
    %cst_40 = arith.constant 1.000000e+00 : f32
    %216 = vector.broadcast %cst_40 : f32 to vector<8x128xf32>
    %217 = arith.subf %216, %210 : vector<8x128xf32>
    %218 = arith.mulf %217, %215 : vector<8x128xf32>
    %219 = arith.mulf %210, %190 : vector<8x128xf32>
    %220 = arith.addf %218, %219 : vector<8x128xf32>
    %221 = vector.extract_strided_slice %7 {offsets = [56, 0], sizes = [8, 384], strides = [1, 1]} : vector<64x384xf32> to vector<8x384xf32>
    %cst_41 = arith.constant dense<0.000000e+00> : vector<8x384xf32>
    %222 = tpu.matmul %220, %8, %cst_41 {dimension_numbers = #tpu.dot_dimension_numbers<[1], [0], [0], [1], [0, 0, 1, 1], [], []>} : vector<8x128xf32>, vector<128x384xf32>, vector<8x384xf32> -> vector<8x384xf32>
    %223 = vector.broadcast %9 : vector<1x384xf32> to vector<8x384xf32>
    %224 = arith.addf %222, %223 : vector<8x384xf32>
    %225 = vector.extract_strided_slice %221 {offsets = [0, 0], sizes = [8, 128], strides = [1, 1]} : vector<8x384xf32> to vector<8x128xf32>
    %226 = vector.extract_strided_slice %224 {offsets = [0, 0], sizes = [8, 128], strides = [1, 1]} : vector<8x384xf32> to vector<8x128xf32>
    %227 = arith.addf %225, %226 : vector<8x128xf32>
    %228 = arith.negf %227 : vector<8x128xf32>
    %229 = math.exp %228 : vector<8x128xf32>
    %cst_42 = arith.constant 1.000000e+00 : f32
    %230 = vector.broadcast %cst_42 : f32 to vector<8x128xf32>
    %231 = arith.addf %230, %229 : vector<8x128xf32>
    %232 = arith.divf %230, %231 : vector<8x128xf32>
    %233 = vector.extract_strided_slice %221 {offsets = [0, 128], sizes = [8, 128], strides = [1, 1]} : vector<8x384xf32> to vector<8x128xf32>
    %234 = vector.extract_strided_slice %224 {offsets = [0, 128], sizes = [8, 128], strides = [1, 1]} : vector<8x384xf32> to vector<8x128xf32>
    %235 = arith.addf %233, %234 : vector<8x128xf32>
    %236 = arith.negf %235 : vector<8x128xf32>
    %237 = math.exp %236 : vector<8x128xf32>
    %cst_43 = arith.constant 1.000000e+00 : f32
    %238 = vector.broadcast %cst_43 : f32 to vector<8x128xf32>
    %239 = arith.addf %238, %237 : vector<8x128xf32>
    %240 = arith.divf %238, %239 : vector<8x128xf32>
    %241 = vector.extract_strided_slice %221 {offsets = [0, 256], sizes = [8, 128], strides = [1, 1]} : vector<8x384xf32> to vector<8x128xf32>
    %242 = vector.extract_strided_slice %224 {offsets = [0, 256], sizes = [8, 128], strides = [1, 1]} : vector<8x384xf32> to vector<8x128xf32>
    %243 = arith.mulf %232, %242 : vector<8x128xf32>
    %244 = arith.addf %241, %243 : vector<8x128xf32>
    %245 = math.tanh %244 : vector<8x128xf32>
    %cst_44 = arith.constant 1.000000e+00 : f32
    %246 = vector.broadcast %cst_44 : f32 to vector<8x128xf32>
    %247 = arith.subf %246, %240 : vector<8x128xf32>
    %248 = arith.mulf %247, %245 : vector<8x128xf32>
    %249 = arith.mulf %240, %220 : vector<8x128xf32>
    %250 = arith.addf %248, %249 : vector<8x128xf32>
    %251 = tpu.concatenate %40, %70, %100, %130, %160, %190, %220, %250 in 0 : vector<8x128xf32>, vector<8x128xf32>, vector<8x128xf32>, vector<8x128xf32>, vector<8x128xf32>, vector<8x128xf32>, vector<8x128xf32>, vector<8x128xf32> -> vector<64x128xf32>
    %c0_45 = arith.constant 0 : index
    %c0_46 = arith.constant 0 : index
    %252 = vector.load %arg7[%c0_45, %c0_46] : memref<64x64xf32, #tpu.memory_space<vmem>>, vector<64x64xf32>
    %cst_47 = arith.constant dense<0.000000e+00> : vector<64x128xf32>
    %253 = tpu.matmul %252, %251, %cst_47 {dimension_numbers = #tpu.dot_dimension_numbers<[1], [0], [0], [1], [0, 0, 1, 1], [], []>} : vector<64x64xf32>, vector<64x128xf32>, vector<64x128xf32> -> vector<64x128xf32>
    %c0_48 = arith.constant 0 : index
    %c0_49 = arith.constant 0 : index
    %254 = vector.load %arg8[%c0_48, %c0_49] : memref<64x1xf32, #tpu.memory_space<vmem>>, vector<64x1xf32>
    %255 = vector.broadcast %254 : vector<64x1xf32> to vector<64x128xf32>
    %256 = arith.addf %253, %255 : vector<64x128xf32>
    %257 = vector.shape_cast %256 : vector<64x128xf32> to vector<8x8x128xf32>
    %258 = vector.shape_cast %251 : vector<64x128xf32> to vector<8x8x128xf32>
    %cst_50 = arith.constant dense<0xFF800000> : vector<8x128xf32>
    %259 = vector.multi_reduction <maximumf>, %257, %cst_50 [0] : vector<8x8x128xf32> to vector<8x128xf32>
    %260 = vector.shape_cast %259 : vector<8x128xf32> to vector<1x8x128xf32>
    %261 = vector.broadcast %260 : vector<1x8x128xf32> to vector<8x8x128xf32>
    %262 = arith.subf %257, %261 : vector<8x8x128xf32>
    %263 = math.exp %262 : vector<8x8x128xf32>
    %cst_51 = arith.constant dense<0.000000e+00> : vector<8x128xf32>
    %264 = vector.multi_reduction <add>, %263, %cst_51 [0] : vector<8x8x128xf32> to vector<8x128xf32>
    %265 = vector.shape_cast %264 : vector<8x128xf32> to vector<1x8x128xf32>
    %266 = tpu.reciprocal %265 : vector<1x8x128xf32> -> vector<1x8x128xf32>
    %267 = vector.broadcast %266 : vector<1x8x128xf32> to vector<8x8x128xf32>
    %268 = arith.mulf %263, %267 : vector<8x8x128xf32>
    %269 = arith.mulf %268, %258 : vector<8x8x128xf32>
    %cst_52 = arith.constant dense<0.000000e+00> : vector<8x128xf32>
    %270 = vector.multi_reduction <add>, %269, %cst_52 [0] : vector<8x8x128xf32> to vector<8x128xf32>
    %c0_53 = arith.constant 0 : index
    %c0_54 = arith.constant 0 : index
    %271 = vector.load %arg9[%c0_53, %c0_54] : memref<8x128xf32, #tpu.memory_space<vmem>>, vector<8x128xf32>
    tpu.vector_store %arg9[%c0_53, %c0_54], %270 {strides = array<i32>} : memref<8x128xf32, #tpu.memory_space<vmem>>, vector<8x128xf32>,
    return
  }
  func.func @transform_0(%arg0: i32) -> (i32, i32) {
    %c0_i32 = arith.constant 0 : i32
    %c0_i32_0 = arith.constant 0 : i32
    return %arg0, %c0_i32 : i32, i32
  }
  func.func @transform_1(%arg0: i32) -> (i32, i32) {
    %c0_i32 = arith.constant 0 : i32
    %c0_i32_0 = arith.constant 0 : i32
    %c0_i32_1 = arith.constant 0 : i32
    return %c0_i32, %c0_i32_0 : i32, i32
  }
  func.func @transform_2(%arg0: i32) -> (i32, i32) {
    %c0_i32 = arith.constant 0 : i32
    %c0_i32_0 = arith.constant 0 : i32
    %c0_i32_1 = arith.constant 0 : i32
    return %c0_i32, %c0_i32_0 : i32, i32
  }
  func.func @transform_3(%arg0: i32) -> (i32, i32) {
    %c0_i32 = arith.constant 0 : i32
    %c0_i32_0 = arith.constant 0 : i32
    %c0_i32_1 = arith.constant 0 : i32
    return %c0_i32, %c0_i32_0 : i32, i32
  }
  func.func @transform_4(%arg0: i32) -> (i32, i32) {
    %c0_i32 = arith.constant 0 : i32
    %c0_i32_0 = arith.constant 0 : i32
    %c0_i32_1 = arith.constant 0 : i32
    return %c0_i32, %c0_i32_0 : i32, i32
  }
  func.func @transform_5(%arg0: i32) -> (i32, i32) {
    %c0_i32 = arith.constant 0 : i32
    %c0_i32_0 = arith.constant 0 : i32
    %c0_i32_1 = arith.constant 0 : i32
    return %c0_i32, %c0_i32_0 : i32, i32
  }
  func.func @transform_6(%arg0: i32) -> (i32, i32) {
    %c0_i32 = arith.constant 0 : i32
    %c0_i32_0 = arith.constant 0 : i32
    %c0_i32_1 = arith.constant 0 : i32
    return %c0_i32, %c0_i32_0 : i32, i32
  }
  func.func @transform_7(%arg0: i32) -> (i32, i32) {
    %c0_i32 = arith.constant 0 : i32
    %c0_i32_0 = arith.constant 0 : i32
    %c0_i32_1 = arith.constant 0 : i32
    return %c0_i32, %c0_i32_0 : i32, i32
  }
  func.func @transform_8(%arg0: i32) -> (i32, i32) {
    %c0_i32 = arith.constant 0 : i32
    %c0_i32_0 = arith.constant 0 : i32
    return %arg0, %c0_i32 : i32, i32
  }
}

</mosaic_0001>

<llo_original>
// kernel: tpu_custom_call.1
$region0: #{tpu_custom_call.1}
  #allocation0 [shape = 'u32[]', space=smem, size = 0x4, offset = 0x4, fixed_abs, tag = 'smem constant byte address 0x4 - core index']
  #allocation1 [shape = 'u32[144,128]{1,0:T(1,128)}', space=vmem, size = 0x12000, scoped, tag = 'internal scratch']
  %s0 = inlined_call_operand.vmem [shape: f32[32,8], index: 0, kind: input, shape index: {}]
  %s1 = inlined_call_operand.vmem [shape: f32[64,32], index: 1, kind: input, shape index: {}]
  %s2 = inlined_call_operand.vmem [shape: f32[8,384], index: 2, kind: input, shape index: {}]
  %s3 = inlined_call_operand.hbm [shape: f32[128,384], index: 3, kind: input, shape index: {}]
  %s4 = inlined_call_operand.vmem [shape: f32[1,384], index: 4, kind: input, shape index: {}]
  %s5 = inlined_call_operand.vmem [shape: f32[1,384], index: 5, kind: input, shape index: {}]
  %s6 = inlined_call_operand.vmem [shape: f32[64,64], index: 6, kind: input, shape index: {}]
  %s7 = inlined_call_operand.vmem [shape: f32[64,1], index: 7, kind: input, shape index: {}]
  %s8 = inlined_call_operand.hbm [shape: f32[8,128], index: 8, kind: output, shape index: {}]
  %s9 = sld [smem:[#allocation0]]
  $region46: #{tpu_custom_call.1} parent=0
    _
  %s11 = ssub.s32 1, %s9
  %s12 = scalar_select 0, %s11, %s9
  $region1: #{tpu_custom_call.1} parent=0
    #allocation2 [shape = 'u8[196608]{0}', space=vmem, size = 0x30000, scoped, tag = 'input window, operand 3, single buffered']
    #allocation3 [shape = 's32[1]{0}', space=sflag, size = 0x4, scoped, tag = 'scoped memory for tpu_custom_call.1']
    #allocation4 [shape = 's32[1]{0}', space=sflag, size = 0x4, scoped, tag = 'scoped memory for tpu_custom_call.1']
    #allocation5 [shape = 'u8[4096]{0}', space=vmem, size = 0x1000, scoped, tag = 'output window, operand 0, single buffered']
    %13 = vsyncpa [#allocation3], 0
    %14 = vsyncpa [#allocation4], 0
    // Predicated region
    $region2: #{tpu_custom_call.1} parent=1 // pred_check
      _
    $region3: #{tpu_custom_call.1} parent=1 // pred_check_branch
      %16 = sbr.rel (0) target = $region5
    $region4: #{tpu_custom_call.1} parent=1 // pred_region
      _
    $region5: #{tpu_custom_call.1} parent=1 // pred_fallthru
      _
    // Predicated region
    $region6: #{tpu_custom_call.1} parent=1 // pred_check
      _
    $region7: #{tpu_custom_call.1} parent=1 // pred_check_branch
      %18 = sbr.rel (0) target = $region9
    $region8: #{tpu_custom_call.1} parent=1 // pred_region
      _
    $region9: #{tpu_custom_call.1} parent=1 // pred_fallthru
      _
    // Predicated region
    $region10: #{tpu_custom_call.1} parent=1 // pred_check
      _
    $region11: #{tpu_custom_call.1} parent=1 // pred_check_branch
      %20 = sbr.rel (0) target = $region13
    $region12: #{tpu_custom_call.1} parent=1 // pred_region
      _
    $region13: #{tpu_custom_call.1} parent=1 // pred_fallthru
      _
    // Predicated region
    $region14: #{tpu_custom_call.1} parent=1 // pred_check
      _
    $region15: #{tpu_custom_call.1} parent=1 // pred_check_branch
      %22 = sbr.rel (0) target = $region17
    $region16: #{tpu_custom_call.1} parent=1 // pred_region
      %s24 = ssub.s32 6144, 6144
      %25 = vsyncadd [#allocation3], %s24
      %s26 = sshll.u32 [#allocation2], 4
      %s27 = int_to_ptr.vmem [resolvable:$true] %s26
      %32 = dma.hbm_to_vmem [thread:$0]  %s3, 6144, %s27, [#allocation3], 384, 384, 24
    $region17: #{tpu_custom_call.1} parent=1 // pred_fallthru
      _
    // Predicated region
    $region18: #{tpu_custom_call.1} parent=1 // pred_check
      _
    $region19: #{tpu_custom_call.1} parent=1 // pred_check_branch
      %34 = sbr.rel (0) target = $region21
    $region20: #{tpu_custom_call.1} parent=1 // pred_region
      _
    $region21: #{tpu_custom_call.1} parent=1 // pred_fallthru
      _
    // Predicated region
    $region22: #{tpu_custom_call.1} parent=1 // pred_check
      _
    $region23: #{tpu_custom_call.1} parent=1 // pred_check_branch
      %36 = sbr.rel (0) target = $region25
    $region24: #{tpu_custom_call.1} parent=1 // pred_region
      _
    $region25: #{tpu_custom_call.1} parent=1 // pred_fallthru
      _
    // Predicated region
    $region26: #{tpu_custom_call.1} parent=1 // pred_check
      _
    $region27: #{tpu_custom_call.1} parent=1 // pred_check_branch
      %38 = sbr.rel (0) target = $region29
    $region28: #{tpu_custom_call.1} parent=1 // pred_region
      _
    $region29: #{tpu_custom_call.1} parent=1 // pred_fallthru
      _
    // Predicated region
    $region30: #{tpu_custom_call.1} parent=1 // pred_check
      _
    $region31: #{tpu_custom_call.1} parent=1 // pred_check_branch
      %40 = sbr.rel (0) target = $region33
    $region32: #{tpu_custom_call.1} parent=1 // pred_region
      _
    $region33: #{tpu_custom_call.1} parent=1 // pred_fallthru
      _
    // Predicated region
    $region34: #{tpu_custom_call.1} parent=1 // pred_check
      _
    $region35: #{tpu_custom_call.1} parent=1 // pred_check_branch
      %42 = sbr.rel (0) target = $region37
    $region36: #{tpu_custom_call.1} parent=1 // pred_region
      %43 = dma.done [#allocation3], 6144
    $region37: #{tpu_custom_call.1} parent=1 // pred_fallthru
      _
    %v44 = vld [vmem:[%s1] sm:$0xff]
    %v45 = vld [vmem:[%s1 + $0x8] sm:$0xff]
    %v46 = vld [vmem:[%s1 + $0x10] sm:$0xff]
    %v47 = vld [vmem:[%s1 + $0x18] sm:$0xff]
    %v48 = vld [vmem:[%s1 + $0x20] sm:$0xff]
    %v49 = vld [vmem:[%s1 + $0x28] sm:$0xff]
    %v50 = vld [vmem:[%s1 + $0x30] sm:$0xff]
    %v51 = vld [vmem:[%s1 + $0x38] sm:$0xff]
    %v52 = vld [vmem:[%s0] sm:$0xff]
    %v53 = vld [vmem:[%s0 + $0x8] sm:$0xff]
    %v54 = vld [vmem:[%s0 + $0x10] sm:$0xff]
    %v55 = vld [vmem:[%s0 + $0x18] sm:$0xff]
    %vm56 = vcmask 261120
    %v58 = vsel %vm56, %v44, 0
    %v61 = vsel %vm56, %v45, 0
    %v64 = vsel %vm56, %v46, 0
    %v67 = vsel %vm56, %v47, 0
    %v70 = vsel %vm56, %v48, 0
    %v73 = vsel %vm56, %v49, 0
    %v76 = vsel %vm56, %v50, 0
    %v79 = vsel %vm56, %v51, 0
    %81 = vmatprep.subr.mxu0 0.0
    %82 = vmatpush1.msra.mxu0 %v52
    %83 = vmatprep.subr.mxu0 0.0
    %84 = vmatpush1.msra.mxu0 %v53
    %85 = vmatprep.subr.mxu0 0.0
    %86 = vmatpush1.msra.mxu0 %v54
    %87 = vmatprep.subr.mxu0 0.0
    %88 = vmatpush1.msra.mxu0 %v55
    %89 = vmatprep.subr.mxu0 0.0
    %90 = vmatpush1.msra.mxu0 0.0
    %91 = vmatprep.subr.mxu0 0.0
    %92 = vmatpush1.msra.mxu0 0.0
    %93 = vmatprep.subr.mxu0 0.0
    %94 = vmatpush1.msra.mxu0 0.0
    %95 = vmatprep.subr.mxu0 0.0
    %96 = vmatpush1.msra.mxu0 0.0
    %97 = vmatprep.subr.mxu0 0.0
    %98 = vmatpush1.msra.mxu0 0.0
    %99 = vmatprep.subr.mxu0 0.0
    %100 = vmatpush1.msra.mxu0 0.0
    %101 = vmatprep.subr.mxu0 0.0
    %102 = vmatpush1.msra.mxu0 0.0
    %103 = vmatprep.subr.mxu0 0.0
    %104 = vmatpush1.msra.mxu0 0.0
    %105 = vmatprep.subr.mxu0 0.0
    %106 = vmatpush1.msra.mxu0 0.0
    %107 = vmatprep.subr.mxu0 0.0
    %108 = vmatpush1.msra.mxu0 0.0
    %109 = vmatprep.subr.mxu0 0.0
    %110 = vmatpush1.msra.mxu0 0.0
    %111 = vmatprep.subr.mxu0 0.0
    %112 = vmatpush1.msra.mxu0 0.0
    %113 = vmatprep.subr.mxu0 0.0
    %114 = vmatpush1.msra.mxu0 0.0
    %115 = vmatprep.subr.mxu0 0.0
    %116 = vmatpush1.msra.mxu0 0.0
    %117 = vmatprep.subr.mxu0 0.0
    %118 = vmatpush1.msra.mxu0 0.0
    %119 = vmatprep.subr.mxu0 0.0
    %120 = vmatpush1.msra.mxu0 0.0
    %121 = vmatprep.subr.mxu0 0.0
    %122 = vmatpush1.msra.mxu0 0.0
    %123 = vmatprep.subr.mxu0 0.0
    %124 = vmatpush1.msra.mxu0 0.0
    %125 = vmatprep.subr.mxu0 0.0
    %126 = vmatpush1.msra.mxu0 0.0
    %127 = vmatprep.subr.mxu0 0.0
    %128 = vmatpush1.msra.mxu0 0.0
    %129 = vmatprep.subr.mxu0 0.0
    %130 = vmatpush1.msra.mxu0 0.0
    %131 = vmatprep.subr.mxu0 0.0
    %132 = vmatpush1.msra.mxu0 0.0
    %133 = vmatprep.subr.mxu0 0.0
    %134 = vmatpush1.msra.mxu0 0.0
    %135 = vmatprep.subr.mxu0 0.0
    %136 = vmatpush1.msra.mxu0 0.0
    %137 = vmatprep.subr.mxu0 0.0
    %138 = vmatpush1.msra.mxu0 0.0
    %139 = vmatprep.subr.mxu0 0.0
    %140 = vmatpush1.msra.mxu0 0.0
    %141 = vmatprep.subr.mxu0 0.0
    %142 = vmatpush1.msra.mxu0 0.0
    %143 = vmatprep.subr.mxu0 0.0
    %144 = vmatpush1.msra.mxu0 0.0
    %145 = vmatprep.mubr.f32.mxu0 0.0
    %146 = vmatmul.mubr.f32.gmra.mrb[0].mxu0 %v58
    %v147 = vpop.f32.mrb[0].mxu0
    %v148 = vadd.f32 0.0, %v147
    %v149 = vpop.f32.mrb[0].mxu0
    %150 = vmatprep.mubr.f32.mxu0 0.0
    %151 = vmatmul.mubr.f32.gmra.mrb[0].mxu0 %v61
    %v152 = vpop.f32.mrb[0].mxu0
    %v153 = vadd.f32 0.0, %v152
    %v154 = vpop.f32.mrb[0].mxu0
    %155 = vmatprep.mubr.f32.mxu0 0.0
    %156 = vmatmul.mubr.f32.gmra.mrb[0].mxu0 %v64
    %v157 = vpop.f32.mrb[0].mxu0
    %v158 = vadd.f32 0.0, %v157
    %v159 = vpop.f32.mrb[0].mxu0
    %160 = vmatprep.mubr.f32.mxu0 0.0
    %161 = vmatmul.mubr.f32.gmra.mrb[0].mxu0 %v67
    %v162 = vpop.f32.mrb[0].mxu0
    %v163 = vadd.f32 0.0, %v162
    %v164 = vpop.f32.mrb[0].mxu0
    %165 = vmatprep.mubr.f32.mxu0 0.0
    %166 = vmatmul.mubr.f32.gmra.mrb[0].mxu0 %v70
    %v167 = vpop.f32.mrb[0].mxu0
    %v168 = vadd.f32 0.0, %v167
    %v169 = vpop.f32.mrb[0].mxu0
    %170 = vmatprep.mubr.f32.mxu0 0.0
    %171 = vmatmul.mubr.f32.gmra.mrb[0].mxu0 %v73
    %v172 = vpop.f32.mrb[0].mxu0
    %v173 = vadd.f32 0.0, %v172
    %v174 = vpop.f32.mrb[0].mxu0
    %175 = vmatprep.mubr.f32.mxu0 0.0
    %176 = vmatmul.mubr.f32.gmra.mrb[0].mxu0 %v76
    %v177 = vpop.f32.mrb[0].mxu0
    %v178 = vadd.f32 0.0, %v177
    %v179 = vpop.f32.mrb[0].mxu0
    %180 = vmatprep.mubr.f32.mxu0 0.0
    %181 = vmatmul.mubr.f32.gmra.mrb[0].mxu0 %v79
    %v182 = vpop.f32.mrb[0].mxu0
    %v183 = vadd.f32 0.0, %v182
    %v184 = vpop.f32.mrb[0].mxu0
    %185 = vdwg.mxu0
    %v186 = vld [vmem:[%s2] sm:$0xff]
    %v187 = vld [vmem:[%s2 + $0x8] sm:$0xff]
    %v188 = vld [vmem:[%s2 + $0x10] sm:$0xff]
    %v189 = vld [vmem:[%s4] sm:$0x7]
    %v191 = vlaneseq
    %v192 = vshrl.u32 %v191, 7
    %v193 = vsub.s32 0, %v192
    %v194 = vrot.slane %v189, %v193
    %v195 = vlaneseq
    %v196 = vshrl.u32 %v195, 7
    %v197 = vsub.s32 1, %v196
    %v198 = vrot.slane %v189, %v197
    %v199 = vlaneseq
    %v200 = vshrl.u32 %v199, 7
    %v201 = vsub.s32 2, %v200
    %v202 = vrot.slane %v189, %v201
    %vm206 = vcmask 64512
    %v208 = vsel %vm206, %v148, 0
    %v211 = vsel %vm206, %v153, 0
    %v214 = vsel %vm206, %v158, 0
    %v217 = vsel %vm206, %v163, 0
    %v220 = vsel %vm206, %v168, 0
    %v223 = vsel %vm206, %v173, 0
    %v226 = vsel %vm206, %v178, 0
    %v229 = vsel %vm206, %v183, 0
    %231 = vmatprep.subr.mxu0 %v187
    %232 = vmatpush1.msra.mxu0 %v186
    %233 = vmatprep.subr.mxu0 0.0
    %234 = vmatpush1.msra.mxu0 0.0
    %235 = vmatprep.subr.mxu0 0.0
    %236 = vmatpush1.msra.mxu0 0.0
    %237 = vmatprep.subr.mxu0 0.0
    %238 = vmatpush1.msra.mxu0 0.0
    %239 = vmatprep.subr.mxu0 0.0
    %240 = vmatpush1.msra.mxu0 0.0
    %241 = vmatprep.subr.mxu0 0.0
    %242 = vmatpush1.msra.mxu0 0.0
    %243 = vmatprep.subr.mxu0 0.0
    %244 = vmatpush1.msra.mxu0 0.0
    %245 = vmatprep.subr.mxu0 0.0
    %246 = vmatpush1.msra.mxu0 0.0
    %247 = vmatprep.subr.mxu0 0.0
    %248 = vmatpush1.msra.mxu0 0.0
    %249 = vmatprep.subr.mxu0 0.0
    %250 = vmatpush1.msra.mxu0 0.0
    %251 = vmatprep.subr.mxu0 0.0
    %252 = vmatpush1.msra.mxu0 0.0
    %253 = vmatprep.subr.mxu0 0.0
    %254 = vmatpush1.msra.mxu0 0.0
    %255 = vmatprep.subr.mxu0 0.0
    %256 = vmatpush1.msra.mxu0 0.0
    %257 = vmatprep.subr.mxu0 0.0
    %258 = vmatpush1.msra.mxu0 0.0
    %259 = vmatprep.subr.mxu0 0.0
    %260 = vmatpush1.msra.mxu0 0.0
    %261 = vmatprep.subr.mxu0 0.0
    %262 = vmatpush1.msra.mxu0 0.0
    %263 = vmatprep.subr.mxu0 0.0
    %264 = vmatpush1.msra.mxu0 0.0
    %265 = vmatprep.subr.mxu0 0.0
    %266 = vmatpush1.msra.mxu0 0.0
    %267 = vmatprep.subr.mxu0 0.0
    %268 = vmatpush1.msra.mxu0 0.0
    %269 = vmatprep.subr.mxu0 0.0
    %270 = vmatpush1.msra.mxu0 0.0
    %271 = vmatprep.subr.mxu0 0.0
    %272 = vmatpush1.msra.mxu0 0.0
    %273 = vmatprep.subr.mxu0 0.0
    %274 = vmatpush1.msra.mxu0 0.0
    %275 = vmatprep.subr.mxu0 0.0
    %276 = vmatpush1.msra.mxu0 0.0
    %277 = vmatprep.subr.mxu0 0.0
    %278 = vmatpush1.msra.mxu0 0.0
    %279 = vmatprep.subr.mxu0 0.0
    %280 = vmatpush1.msra.mxu0 0.0
    %281 = vmatprep.subr.mxu0 0.0
    %282 = vmatpush1.msra.mxu0 0.0
    %283 = vmatprep.subr.mxu0 0.0
    %284 = vmatpush1.msra.mxu0 0.0
    %285 = vmatprep.subr.mxu0 0.0
    %286 = vmatpush1.msra.mxu0 0.0
    %287 = vmatprep.subr.mxu0 0.0
    %288 = vmatpush1.msra.mxu0 0.0
    %289 = vmatprep.subr.mxu0 0.0
    %290 = vmatpush1.msra.mxu0 0.0
    %291 = vmatprep.subr.mxu0 0.0
    %292 = vmatpush1.msra.mxu0 0.0
    %293 = vmatprep.subr.mxu0 0.0
    %294 = vmatpush1.msra.mxu0 0.0
    %295 = vmatprep.mubr.f32.mxu0 0.0
    %296 = vmatmul.mubr.f32.gmra.mrb[0].mxu0 %v208
    %v297 = vpop.f32.mrb[0].mxu0
    %v298 = vadd.f32 %v194, %v297
    %v299 = vpop.f32.mrb[0].mxu0
    %v300 = vadd.f32 %v198, %v299
    %301 = vmatprep.mubr.f32.mxu0 0.0
    %302 = vmatmul.mubr.f32.gmra.mrb[0].mxu0 %v211
    %v303 = vpop.f32.mrb[0].mxu0
    %v304 = vadd.f32 %v194, %v303
    %v305 = vpop.f32.mrb[0].mxu0
    %v306 = vadd.f32 %v198, %v305
    %307 = vmatprep.mubr.f32.mxu0 0.0
    %308 = vmatmul.mubr.f32.gmra.mrb[0].mxu0 %v214
    %v309 = vpop.f32.mrb[0].mxu0
    %v310 = vadd.f32 %v194, %v309
    %v311 = vpop.f32.mrb[0].mxu0
    %v312 = vadd.f32 %v198, %v311
    %313 = vmatprep.mubr.f32.mxu0 0.0
    %314 = vmatmul.mubr.f32.gmra.mrb[0].mxu0 %v217
    %v315 = vpop.f32.mrb[0].mxu0
    %v316 = vadd.f32 %v194, %v315
    %v317 = vpop.f32.mrb[0].mxu0
    %v318 = vadd.f32 %v198, %v317
    %319 = vmatprep.mubr.f32.mxu0 0.0
    %320 = vmatmul.mubr.f32.gmra.mrb[0].mxu0 %v220
    %v321 = vpop.f32.mrb[0].mxu0
    %v322 = vadd.f32 %v194, %v321
    %v323 = vpop.f32.mrb[0].mxu0
    %v324 = vadd.f32 %v198, %v323
    %325 = vmatprep.mubr.f32.mxu0 0.0
    %326 = vmatmul.mubr.f32.gmra.mrb[0].mxu0 %v223
    %v327 = vpop.f32.mrb[0].mxu0
    %v328 = vadd.f32 %v194, %v327
    %v329 = vpop.f32.mrb[0].mxu0
    %v330 = vadd.f32 %v198, %v329
    %331 = vmatprep.mubr.f32.mxu0 0.0
    %332 = vmatmul.mubr.f32.gmra.mrb[0].mxu0 %v226
    %v333 = vpop.f32.mrb[0].mxu0
    %v334 = vadd.f32 %v194, %v333
    %v335 = vpop.f32.mrb[0].mxu0
    %v336 = vadd.f32 %v198, %v335
    %337 = vmatprep.mubr.f32.mxu0 0.0
    %338 = vmatmul.mubr.f32.gmra.mrb[0].mxu0 %v229
    %v339 = vpop.f32.mrb[0].mxu0
    %v340 = vadd.f32 %v194, %v339
    %v341 = vpop.f32.mrb[0].mxu0
    %v342 = vadd.f32 %v198, %v341
    %343 = vdwg.mxu0
    %344 = vmatprep.subr.mxu0 0.0
    %345 = vmatpush1.msra.mxu0 %v188
    %346 = vmatprep.subr.mxu0 0.0
    %347 = vmatpush1.msra.mxu0 0.0
    %348 = vmatprep.subr.mxu0 0.0
    %349 = vmatpush1.msra.mxu0 0.0
    %350 = vmatprep.subr.mxu0 0.0
    %351 = vmatpush1.msra.mxu0 0.0
    %352 = vmatprep.subr.mxu0 0.0
    %353 = vmatpush1.msra.mxu0 0.0
    %354 = vmatprep.subr.mxu0 0.0
    %355 = vmatpush1.msra.mxu0 0.0
    %356 = vmatprep.subr.mxu0 0.0
    %357 = vmatpush1.msra.mxu0 0.0
    %358 = vmatprep.subr.mxu0 0.0
    %359 = vmatpush1.msra.mxu0 0.0
    %360 = vmatprep.subr.mxu0 0.0
    %361 = vmatpush1.msra.mxu0 0.0
    %362 = vmatprep.subr.mxu0 0.0
    %363 = vmatpush1.msra.mxu0 0.0
    %364 = vmatprep.subr.mxu0 0.0
    %365 = vmatpush1.msra.mxu0 0.0
    %366 = vmatprep.subr.mxu0 0.0
    %367 = vmatpush1.msra.mxu0 0.0
    %368 = vmatprep.subr.mxu0 0.0
    %369 = vmatpush1.msra.mxu0 0.0
    %370 = vmatprep.subr.mxu0 0.0
    %371 = vmatpush1.msra.mxu0 0.0
    %372 = vmatprep.subr.mxu0 0.0
    %373 = vmatpush1.msra.mxu0 0.0
    %374 = vmatprep.subr.mxu0 0.0
    %375 = vmatpush1.msra.mxu0 0.0
    %376 = vmatprep.subr.mxu0 0.0
    %377 = vmatpush1.msra.mxu0 0.0
    %378 = vmatprep.subr.mxu0 0.0
    %379 = vmatpush1.msra.mxu0 0.0
    %380 = vmatprep.subr.mxu0 0.0
    %381 = vmatpush1.msra.mxu0 0.0
    %382 = vmatprep.subr.mxu0 0.0
    %383 = vmatpush1.msra.mxu0 0.0
    %384 = vmatprep.subr.mxu0 0.0
    %385 = vmatpush1.msra.mxu0 0.0
    %386 = vmatprep.subr.mxu0 0.0
    %387 = vmatpush1.msra.mxu0 0.0
    %388 = vmatprep.subr.mxu0 0.0
    %389 = vmatpush1.msra.mxu0 0.0
    %390 = vmatprep.subr.mxu0 0.0
    %391 = vmatpush1.msra.mxu0 0.0
    %392 = vmatprep.subr.mxu0 0.0
    %393 = vmatpush1.msra.mxu0 0.0
    %394 = vmatprep.subr.mxu0 0.0
    %395 = vmatpush1.msra.mxu0 0.0
    %396 = vmatprep.subr.mxu0 0.0
    %397 = vmatpush1.msra.mxu0 0.0
    %398 = vmatprep.subr.mxu0 0.0
    %399 = vmatpush1.msra.mxu0 0.0
    %400 = vmatprep.subr.mxu0 0.0
    %401 = vmatpush1.msra.mxu0 0.0
    %402 = vmatprep.subr.mxu0 0.0
    %403 = vmatpush1.msra.mxu0 0.0
    %404 = vmatprep.subr.mxu0 0.0
    %405 = vmatpush1.msra.mxu0 0.0
    %406 = vmatprep.subr.mxu0 0.0
    %407 = vmatpush1.msra.mxu0 0.0
    %408 = vmatprep.mubr.f32.mxu0 0.0
    %409 = vmatmul.mubr.f32.gmra.mrb[0].mxu0 %v208
    %v410 = vpop.f32.mrb[0].mxu0
    %v411 = vadd.f32 %v202, %v410
    %v412 = vpop.f32.mrb[0].mxu0
    %413 = vmatprep.mubr.f32.mxu0 0.0
    %414 = vmatmul.mubr.f32.gmra.mrb[0].mxu0 %v211
    %v415 = vpop.f32.mrb[0].mxu0
    %v416 = vadd.f32 %v202, %v415
    %v417 = vpop.f32.mrb[0].mxu0
    %418 = vmatprep.mubr.f32.mxu0 0.0
    %419 = vmatmul.mubr.f32.gmra.mrb[0].mxu0 %v214
    %v420 = vpop.f32.mrb[0].mxu0
    %v421 = vadd.f32 %v202, %v420
    %v422 = vpop.f32.mrb[0].mxu0
    %423 = vmatprep.mubr.f32.mxu0 0.0
    %424 = vmatmul.mubr.f32.gmra.mrb[0].mxu0 %v217
    %v425 = vpop.f32.mrb[0].mxu0
    %v426 = vadd.f32 %v202, %v425
    %v427 = vpop.f32.mrb[0].mxu0
    %428 = vmatprep.mubr.f32.mxu0 0.0
    %429 = vmatmul.mubr.f32.gmra.mrb[0].mxu0 %v220
    %v430 = vpop.f32.mrb[0].mxu0
    %v431 = vadd.f32 %v202, %v430
    %v432 = vpop.f32.mrb[0].mxu0
    %433 = vmatprep.mubr.f32.mxu0 0.0
    %434 = vmatmul.mubr.f32.gmra.mrb[0].mxu0 %v223
    %v435 = vpop.f32.mrb[0].mxu0
    %v436 = vadd.f32 %v202, %v435
    %v437 = vpop.f32.mrb[0].mxu0
    %438 = vmatprep.mubr.f32.mxu0 0.0
    %439 = vmatmul.mubr.f32.gmra.mrb[0].mxu0 %v226
    %v440 = vpop.f32.mrb[0].mxu0
    %v441 = vadd.f32 %v202, %v440
    %v442 = vpop.f32.mrb[0].mxu0
    %443 = vmatprep.mubr.f32.mxu0 0.0
    %444 = vmatmul.mubr.f32.gmra.mrb[0].mxu0 %v229
    %v445 = vpop.f32.mrb[0].mxu0
    %v446 = vadd.f32 %v202, %v445
    %v447 = vpop.f32.mrb[0].mxu0
    %448 = vdwg.mxu0
    %v449 = vld [vmem:[#allocation2] sm:$0xff]
    %v450 = vld [vmem:[#allocation2 + $0x8] sm:$0xff]
    %v451 = vld [vmem:[#allocation2 + $0x10] sm:$0xff]
    %v452 = vld [vmem:[#allocation2 + $0x18] sm:$0xff]
    %v453 = vld [vmem:[#allocation2 + $0x20] sm:$0xff]
    %v454 = vld [vmem:[#allocation2 + $0x28] sm:$0xff]
    %v455 = vld [vmem:[#allocation2 + $0x30] sm:$0xff]
    %v456 = vld [vmem:[#allocation2 + $0x38] sm:$0xff]
    %v457 = vld [vmem:[#allocation2 + $0x40] sm:$0xff]
    %v458 = vld [vmem:[#allocation2 + $0x48] sm:$0xff]
    %v459 = vld [vmem:[#allocation2 + $0x50] sm:$0xff]
    %v460 = vld [vmem:[#allocation2 + $0x58] sm:$0xff]
    %v461 = vld [vmem:[#allocation2 + $0x60] sm:$0xff]
    %v462 = vld [vmem:[#allocation2 + $0x68] sm:$0xff]
    %v463 = vld [vmem:[#allocation2 + $0x70] sm:$0xff]
    %v464 = vld [vmem:[#allocation2 + $0x78] sm:$0xff]
    %v465 = vld [vmem:[#allocation2 + $0x80] sm:$0xff]
    %v466 = vld [vmem:[#allocation2 + $0x88] sm:$0xff]
    %v467 = vld [vmem:[#allocation2 + $0x90] sm:$0xff]
    %v468 = vld [vmem:[#allocation2 + $0x98] sm:$0xff]
    %v469 = vld [vmem:[#allocation2 + $0xa0] sm:$0xff]
    %v470 = vld [vmem:[#allocation2 + $0xa8] sm:$0xff]
    %v471 = vld [vmem:[#allocation2 + $0xb0] sm:$0xff]
    %v472 = vld [vmem:[#allocation2 + $0xb8] sm:$0xff]
    %v473 = vld [vmem:[#allocation2 + $0xc0] sm:$0xff]
    %v474 = vld [vmem:[#allocation2 + $0xc8] sm:$0xff]
    %v475 = vld [vmem:[#allocation2 + $0xd0] sm:$0xff]
    %v476 = vld [vmem:[#allocation2 + $0xd8] sm:$0xff]
    %v477 = vld [vmem:[#allocation2 + $0xe0] sm:$0xff]
    %v478 = vld [vmem:[#allocation2 + $0xe8] sm:$0xff]
    %v479 = vld [vmem:[#allocation2 + $0xf0] sm:$0xff]
    %v480 = vld [vmem:[#allocation2 + $0xf8] sm:$0xff]
    %v481 = vld [vmem:[#allocation2 + $0x100] sm:$0xff]
    %v482 = vld [vmem:[#allocation2 + $0x108] sm:$0xff]
    %v483 = vld [vmem:[#allocation2 + $0x110] sm:$0xff]
    %v484 = vld [vmem:[#allocation2 + $0x118] sm:$0xff]
    %v485 = vld [vmem:[#allocation2 + $0x120] sm:$0xff]
    %v486 = vld [vmem:[#allocation2 + $0x128] sm:$0xff]
    %v487 = vld [vmem:[#allocation2 + $0x130] sm:$0xff]
    %v488 = vld [vmem:[#allocation2 + $0x138] sm:$0xff]
    %v489 = vld [vmem:[#allocation2 + $0x140] sm:$0xff]
    %v490 = vld [vmem:[#allocation2 + $0x148] sm:$0xff]
    %v491 = vld [vmem:[#allocation2 + $0x150] sm:$0xff]
    %v492 = vld [vmem:[#allocation2 + $0x158] sm:$0xff]
    %v493 = vld [vmem:[#allocation2 + $0x160] sm:$0xff]
    %v494 = vld [vmem:[#allocation2 + $0x168] sm:$0xff]
    %v495 = vld [vmem:[#allocation2 + $0x170] sm:$0xff]
    %v496 = vld [vmem:[#allocation2 + $0x178] sm:$0xff]
    %v497 = vld [vmem:[%s5] sm:$0x7]
    %v499 = vlaneseq
    %v500 = vshrl.u32 %v499, 7
    %v501 = vsub.s32 0, %v500
    %v502 = vrot.slane %v497, %v501
    %v503 = vlaneseq
    %v504 = vshrl.u32 %v503, 7
    %v505 = vsub.s32 1, %v504
    %v506 = vrot.slane %v497, %v505
    %v507 = vlaneseq
    %v508 = vshrl.u32 %v507, 7
    %v509 = vsub.s32 2, %v508
    %v510 = vrot.slane %v497, %v509
    %514 = vmatprep.subr.mxu0 %v450
    %515 = vmatpush1.msra.mxu0 %v449
    %516 = vmatprep.subr.mxu0 %v453
    %517 = vmatpush1.msra.mxu0 %v452
    %518 = vmatprep.subr.mxu0 %v456
    %519 = vmatpush1.msra.mxu0 %v455
    %520 = vmatprep.subr.mxu0 %v459
    %521 = vmatpush1.msra.mxu0 %v458
    %522 = vmatprep.subr.mxu0 %v462
    %523 = vmatpush1.msra.mxu0 %v461
    %524 = vmatprep.subr.mxu0 %v465
    %525 = vmatpush1.msra.mxu0 %v464
    %526 = vmatprep.subr.mxu0 %v468
    %527 = vmatpush1.msra.mxu0 %v467
    %528 = vmatprep.subr.mxu0 %v471
    %529 = vmatpush1.msra.mxu0 %v470
    %530 = vmatprep.subr.mxu0 %v474
    %531 = vmatpush1.msra.mxu0 %v473
    %532 = vmatprep.subr.mxu0 %v477
    %533 = vmatpush1.msra.mxu0 %v476
    %534 = vmatprep.subr.mxu0 %v480
    %535 = vmatpush1.msra.mxu0 %v479
    %536 = vmatprep.subr.mxu0 %v483
    %537 = vmatpush1.msra.mxu0 %v482
    %538 = vmatprep.subr.mxu0 %v486
    %539 = vmatpush1.msra.mxu0 %v485
    %540 = vmatprep.subr.mxu0 %v489
    %541 = vmatpush1.msra.mxu0 %v488
    %542 = vmatprep.subr.mxu0 %v492
    %543 = vmatpush1.msra.mxu0 %v491
    %544 = vmatprep.subr.mxu0 %v495
    %545 = vmatpush1.msra.mxu0 %v494
    %546 = vmatprep.subr.mxu0 0.0
    %547 = vmatpush1.msra.mxu0 0.0
    %548 = vmatprep.subr.mxu0 0.0
    %549 = vmatpush1.msra.mxu0 0.0
    %550 = vmatprep.subr.mxu0 0.0
    %551 = vmatpush1.msra.mxu0 0.0
    %552 = vmatprep.subr.mxu0 0.0
    %553 = vmatpush1.msra.mxu0 0.0
    %554 = vmatprep.subr.mxu0 0.0
    %555 = vmatpush1.msra.mxu0 0.0
    %556 = vmatprep.subr.mxu0 0.0
    %557 = vmatpush1.msra.mxu0 0.0
    %558 = vmatprep.subr.mxu0 0.0
    %559 = vmatpush1.msra.mxu0 0.0
    %560 = vmatprep.subr.mxu0 0.0
    %561 = vmatpush1.msra.mxu0 0.0
    %562 = vmatprep.subr.mxu0 0.0
    %563 = vmatpush1.msra.mxu0 0.0
    %564 = vmatprep.subr.mxu0 0.0
    %565 = vmatpush1.msra.mxu0 0.0
    %566 = vmatprep.subr.mxu0 0.0
    %567 = vmatpush1.msra.mxu0 0.0
    %568 = vmatprep.subr.mxu0 0.0
    %569 = vmatpush1.msra.mxu0 0.0
    %570 = vmatprep.subr.mxu0 0.0
    %571 = vmatpush1.msra.mxu0 0.0
    %572 = vmatprep.subr.mxu0 0.0
    %573 = vmatpush1.msra.mxu0 0.0
    %574 = vmatprep.subr.mxu0 0.0
    %575 = vmatpush1.msra.mxu0 0.0
    %576 = vmatprep.subr.mxu0 0.0
    %577 = vmatpush1.msra.mxu0 0.0
    %578 = vmatprep.mubr.f32.mxu0 0.0
    %579 = vmatmul.mubr.f32.gmra.mrb[0].mxu0 0.0
    %v580 = vpop.f32.mrb[0].mxu0
    %v581 = vadd.f32 %v502, %v580
    %v582 = vpop.f32.mrb[0].mxu0
    %v583 = vadd.f32 %v506, %v582
    %584 = vdwg.mxu0
    %585 = vmatprep.subr.mxu0 0.0
    %586 = vmatpush1.msra.mxu0 %v451
    %587 = vmatprep.subr.mxu0 0.0
    %588 = vmatpush1.msra.mxu0 %v454
    %589 = vmatprep.subr.mxu0 0.0
    %590 = vmatpush1.msra.mxu0 %v457
    %591 = vmatprep.subr.mxu0 0.0
    %592 = vmatpush1.msra.mxu0 %v460
    %593 = vmatprep.subr.mxu0 0.0
    %594 = vmatpush1.msra.mxu0 %v463
    %595 = vmatprep.subr.mxu0 0.0
    %596 = vmatpush1.msra.mxu0 %v466
    %597 = vmatprep.subr.mxu0 0.0
    %598 = vmatpush1.msra.mxu0 %v469
    %599 = vmatprep.subr.mxu0 0.0
    %600 = vmatpush1.msra.mxu0 %v472
    %601 = vmatprep.subr.mxu0 0.0
    %602 = vmatpush1.msra.mxu0 %v475
    %603 = vmatprep.subr.mxu0 0.0
    %604 = vmatpush1.msra.mxu0 %v478
    %605 = vmatprep.subr.mxu0 0.0
    %606 = vmatpush1.msra.mxu0 %v481
    %607 = vmatprep.subr.mxu0 0.0
    %608 = vmatpush1.msra.mxu0 %v484
    %609 = vmatprep.subr.mxu0 0.0
    %610 = vmatpush1.msra.mxu0 %v487
    %611 = vmatprep.subr.mxu0 0.0
    %612 = vmatpush1.msra.mxu0 %v490
    %613 = vmatprep.subr.mxu0 0.0
    %614 = vmatpush1.msra.mxu0 %v493
    %615 = vmatprep.subr.mxu0 0.0
    %616 = vmatpush1.msra.mxu0 %v496
    %617 = vmatprep.subr.mxu0 0.0
    %618 = vmatpush1.msra.mxu0 0.0
    %619 = vmatprep.subr.mxu0 0.0
    %620 = vmatpush1.msra.mxu0 0.0
    %621 = vmatprep.subr.mxu0 0.0
    %622 = vmatpush1.msra.mxu0 0.0
    %623 = vmatprep.subr.mxu0 0.0
    %624 = vmatpush1.msra.mxu0 0.0
    %625 = vmatprep.subr.mxu0 0.0
    %626 = vmatpush1.msra.mxu0 0.0
    %627 = vmatprep.subr.mxu0 0.0
    %628 = vmatpush1.msra.mxu0 0.0
    %629 = vmatprep.subr.mxu0 0.0
    %630 = vmatpush1.msra.mxu0 0.0
    %631 = vmatprep.subr.mxu0 0.0
    %632 = vmatpush1.msra.mxu0 0.0
    %633 = vmatprep.subr.mxu0 0.0
    %634 = vmatpush1.msra.mxu0 0.0
    %635 = vmatprep.subr.mxu0 0.0
    %636 = vmatpush1.msra.mxu0 0.0
    %637 = vmatprep.subr.mxu0 0.0
    %638 = vmatpush1.msra.mxu0 0.0
    %639 = vmatprep.subr.mxu0 0.0
    %640 = vmatpush1.msra.mxu0 0.0
    %641 = vmatprep.subr.mxu0 0.0
    %642 = vmatpush1.msra.mxu0 0.0
    %643 = vmatprep.subr.mxu0 0.0
    %644 = vmatpush1.msra.mxu0 0.0
    %645 = vmatprep.subr.mxu0 0.0
    %646 = vmatpush1.msra.mxu0 0.0
    %647 = vmatprep.subr.mxu0 0.0
    %648 = vmatpush1.msra.mxu0 0.0
    %649 = vmatprep.mubr.f32.mxu0 0.0
    %650 = vmatmul.mubr.f32.gmra.mrb[0].mxu0 0.0
    %v651 = vpop.f32.mrb[0].mxu0
    %v652 = vadd.f32 %v510, %v651
    %v653 = vpop.f32.mrb[0].mxu0
    %654 = vdwg.mxu0
    %v655 = vadd.f32 %v298, %v581
    %v656 = vxor.u32 %v655, 2147483648
    %v657 = vmul.f32 %v656, 1.442695
    %v658 = vpow.pop %v657
    %v659 = vadd.f32 %v658, 1.0
    %v660 = vrcp.pop %v659
    %v661 = vmul.f32 1.0, %v660
    %v662 = vadd.f32 %v300, %v583
    %v663 = vxor.u32 %v662, 2147483648
    %v664 = vmul.f32 %v663, 1.442695
    %v665 = vpow.pop %v664
    %v666 = vadd.f32 %v665, 1.0
    %v667 = vrcp.pop %v666
    %v668 = vmul.f32 1.0, %v667
    %v669 = vmul.f32 %v661, %v652
    %v670 = vadd.f32 %v411, %v669
    %v671 = vtanh.pop %v670
    %v672 = vsub.f32 1.0, %v668
    %v673 = vmul.f32 %v672, %v671
    %v674 = vmul.f32 %v668, 0.0
    %v675 = vadd.f32 %v673, %v674
    %676 = vmatprep.subr.mxu0 %v450
    %677 = vmatpush1.msra.mxu0 %v449
    %678 = vmatprep.subr.mxu0 %v453
    %679 = vmatpush1.msra.mxu0 %v452
    %680 = vmatprep.subr.mxu0 %v456
    %681 = vmatpush1.msra.mxu0 %v455
    %682 = vmatprep.subr.mxu0 %v459
    %683 = vmatpush1.msra.mxu0 %v458
    %684 = vmatprep.subr.mxu0 %v462
    %685 = vmatpush1.msra.mxu0 %v461
    %686 = vmatprep.subr.mxu0 %v465
    %687 = vmatpush1.msra.mxu0 %v464
    %688 = vmatprep.subr.mxu0 %v468
    %689 = vmatpush1.msra.mxu0 %v467
    %690 = vmatprep.subr.mxu0 %v471
    %691 = vmatpush1.msra.mxu0 %v470
    %692 = vmatprep.subr.mxu0 %v474
    %693 = vmatpush1.msra.mxu0 %v473
    %694 = vmatprep.subr.mxu0 %v477
    %695 = vmatpush1.msra.mxu0 %v476
    %696 = vmatprep.subr.mxu0 %v480
    %697 = vmatpush1.msra.mxu0 %v479
    %698 = vmatprep.subr.mxu0 %v483
    %699 = vmatpush1.msra.mxu0 %v482
    %700 = vmatprep.subr.mxu0 %v486
    %701 = vmatpush1.msra.mxu0 %v485
    %702 = vmatprep.subr.mxu0 %v489
    %703 = vmatpush1.msra.mxu0 %v488
    %704 = vmatprep.subr.mxu0 %v492
    %705 = vmatpush1.msra.mxu0 %v491
    %706 = vmatprep.subr.mxu0 %v495
    %707 = vmatpush1.msra.mxu0 %v494
    %708 = vmatprep.subr.mxu0 0.0
    %709 = vmatpush1.msra.mxu0 0.0
    %710 = vmatprep.subr.mxu0 0.0
    %711 = vmatpush1.msra.mxu0 0.0
    %712 = vmatprep.subr.mxu0 0.0
    %713 = vmatpush1.msra.mxu0 0.0
    %714 = vmatprep.subr.mxu0 0.0
    %715 = vmatpush1.msra.mxu0 0.0
    %716 = vmatprep.subr.mxu0 0.0
    %717 = vmatpush1.msra.mxu0 0.0
    %718 = vmatprep.subr.mxu0 0.0
    %719 = vmatpush1.msra.mxu0 0.0
    %720 = vmatprep.subr.mxu0 0.0
    %721 = vmatpush1.msra.mxu0 0.0
    %722 = vmatprep.subr.mxu0 0.0
    %723 = vmatpush1.msra.mxu0 0.0
    %724 = vmatprep.subr.mxu0 0.0
    %725 = vmatpush1.msra.mxu0 0.0
    %726 = vmatprep.subr.mxu0 0.0
    %727 = vmatpush1.msra.mxu0 0.0
    %728 = vmatprep.subr.mxu0 0.0
    %729 = vmatpush1.msra.mxu0 0.0
    %730 = vmatprep.subr.mxu0 0.0
    %731 = vmatpush1.msra.mxu0 0.0
    %732 = vmatprep.subr.mxu0 0.0
    %733 = vmatpush1.msra.mxu0 0.0
    %734 = vmatprep.subr.mxu0 0.0
    %735 = vmatpush1.msra.mxu0 0.0
    %736 = vmatprep.subr.mxu0 0.0
    %737 = vmatpush1.msra.mxu0 0.0
    %738 = vmatprep.subr.mxu0 0.0
    %739 = vmatpush1.msra.mxu0 0.0
    %740 = vmatprep.mubr.f32.mxu0 0.0
    %741 = vmatmul.mubr.f32.gmra.mrb[0].mxu0 %v675
    %v742 = vpop.f32.mrb[0].mxu0
    %v743 = vadd.f32 %v502, %v742
    %v744 = vpop.f32.mrb[0].mxu0
    %v745 = vadd.f32 %v506, %v744
    %746 = vdwg.mxu0
    %747 = vmatprep.subr.mxu0 0.0
    %748 = vmatpush1.msra.mxu0 %v451
    %749 = vmatprep.subr.mxu0 0.0
    %750 = vmatpush1.msra.mxu0 %v454
    %751 = vmatprep.subr.mxu0 0.0
    %752 = vmatpush1.msra.mxu0 %v457
    %753 = vmatprep.subr.mxu0 0.0
    %754 = vmatpush1.msra.mxu0 %v460
    %755 = vmatprep.subr.mxu0 0.0
    %756 = vmatpush1.msra.mxu0 %v463
    %757 = vmatprep.subr.mxu0 0.0
    %758 = vmatpush1.msra.mxu0 %v466
    %759 = vmatprep.subr.mxu0 0.0
    %760 = vmatpush1.msra.mxu0 %v469
    %761 = vmatprep.subr.mxu0 0.0
    %762 = vmatpush1.msra.mxu0 %v472
    %763 = vmatprep.subr.mxu0 0.0
    %764 = vmatpush1.msra.mxu0 %v475
    %765 = vmatprep.subr.mxu0 0.0
    %766 = vmatpush1.msra.mxu0 %v478
    %767 = vmatprep.subr.mxu0 0.0
    %768 = vmatpush1.msra.mxu0 %v481
    %769 = vmatprep.subr.mxu0 0.0
    %770 = vmatpush1.msra.mxu0 %v484
    %771 = vmatprep.subr.mxu0 0.0
    %772 = vmatpush1.msra.mxu0 %v487
    %773 = vmatprep.subr.mxu0 0.0
    %774 = vmatpush1.msra.mxu0 %v490
    %775 = vmatprep.subr.mxu0 0.0
    %776 = vmatpush1.msra.mxu0 %v493
    %777 = vmatprep.subr.mxu0 0.0
    %778 = vmatpush1.msra.mxu0 %v496
    %779 = vmatprep.subr.mxu0 0.0
    %780 = vmatpush1.msra.mxu0 0.0
    %781 = vmatprep.subr.mxu0 0.0
    %782 = vmatpush1.msra.mxu0 0.0
    %783 = vmatprep.subr.mxu0 0.0
    %784 = vmatpush1.msra.mxu0 0.0
    %785 = vmatprep.subr.mxu0 0.0
    %786 = vmatpush1.msra.mxu0 0.0
    %787 = vmatprep.subr.mxu0 0.0
    %788 = vmatpush1.msra.mxu0 0.0
    %789 = vmatprep.subr.mxu0 0.0
    %790 = vmatpush1.msra.mxu0 0.0
    %791 = vmatprep.subr.mxu0 0.0
    %792 = vmatpush1.msra.mxu0 0.0
    %793 = vmatprep.subr.mxu0 0.0
    %794 = vmatpush1.msra.mxu0 0.0
    %795 = vmatprep.subr.mxu0 0.0
    %796 = vmatpush1.msra.mxu0 0.0
    %797 = vmatprep.subr.mxu0 0.0
    %798 = vmatpush1.msra.mxu0 0.0
    %799 = vmatprep.subr.mxu0 0.0
    %800 = vmatpush1.msra.mxu0 0.0
    %801 = vmatprep.subr.mxu0 0.0
    %802 = vmatpush1.msra.mxu0 0.0
    %803 = vmatprep.subr.mxu0 0.0
    %804 = vmatpush1.msra.mxu0 0.0
    %805 = vmatprep.subr.mxu0 0.0
    %806 = vmatpush1.msra.mxu0 0.0
    %807 = vmatprep.subr.mxu0 0.0
    %808 = vmatpush1.msra.mxu0 0.0
    %809 = vmatprep.subr.mxu0 0.0
    %810 = vmatpush1.msra.mxu0 0.0
    %811 = vmatprep.mubr.f32.mxu0 0.0
    %812 = vmatmul.mubr.f32.gmra.mrb[0].mxu0 %v675
    %v813 = vpop.f32.mrb[0].mxu0
    %v814 = vadd.f32 %v510, %v813
    %v815 = vpop.f32.mrb[0].mxu0
    %816 = vdwg.mxu0
    %v817 = vadd.f32 %v304, %v743
    %v818 = vxor.u32 %v817, 2147483648
    %v819 = vmul.f32 %v818, 1.442695
    %v820 = vpow.pop %v819
    %v821 = vadd.f32 %v820, 1.0
    %v822 = vrcp.pop %v821
    %v823 = vmul.f32 1.0, %v822
    %v824 = vadd.f32 %v306, %v745
    %v825 = vxor.u32 %v824, 2147483648
    %v826 = vmul.f32 %v825, 1.442695
    %v827 = vpow.pop %v826
    %v828 = vadd.f32 %v827, 1.0
    %v829 = vrcp.pop %v828
    %v830 = vmul.f32 1.0, %v829
    %v831 = vmul.f32 %v823, %v814
    %v832 = vadd.f32 %v416, %v831
    %v833 = vtanh.pop %v832
    %v834 = vsub.f32 1.0, %v830
    %v835 = vmul.f32 %v834, %v833
    %v836 = vmul.f32 %v830, %v675
    %v837 = vadd.f32 %v835, %v836
    %838 = vmatprep.subr.mxu0 %v450
    %839 = vmatpush1.msra.mxu0 %v449
    %840 = vmatprep.subr.mxu0 %v453
    %841 = vmatpush1.msra.mxu0 %v452
    %842 = vmatprep.subr.mxu0 %v456
    %843 = vmatpush1.msra.mxu0 %v455
    %844 = vmatprep.subr.mxu0 %v459
    %845 = vmatpush1.msra.mxu0 %v458
    %846 = vmatprep.subr.mxu0 %v462
    %847 = vmatpush1.msra.mxu0 %v461
    %848 = vmatprep.subr.mxu0 %v465
    %849 = vmatpush1.msra.mxu0 %v464
    %850 = vmatprep.subr.mxu0 %v468
    %851 = vmatpush1.msra.mxu0 %v467
    %852 = vmatprep.subr.mxu0 %v471
    %853 = vmatpush1.msra.mxu0 %v470
    %854 = vmatprep.subr.mxu0 %v474
    %855 = vmatpush1.msra.mxu0 %v473
    %856 = vmatprep.subr.mxu0 %v477
    %857 = vmatpush1.msra.mxu0 %v476
    %858 = vmatprep.subr.mxu0 %v480
    %859 = vmatpush1.msra.mxu0 %v479
    %860 = vmatprep.subr.mxu0 %v483
    %861 = vmatpush1.msra.mxu0 %v482
    %862 = vmatprep.subr.mxu0 %v486
    %863 = vmatpush1.msra.mxu0 %v485
    %864 = vmatprep.subr.mxu0 %v489
    %865 = vmatpush1.msra.mxu0 %v488
    %866 = vmatprep.subr.mxu0 %v492
    %867 = vmatpush1.msra.mxu0 %v491
    %868 = vmatprep.subr.mxu0 %v495
    %869 = vmatpush1.msra.mxu0 %v494
    %870 = vmatprep.subr.mxu0 0.0
    %871 = vmatpush1.msra.mxu0 0.0
    %872 = vmatprep.subr.mxu0 0.0
    %873 = vmatpush1.msra.mxu0 0.0
    %874 = vmatprep.subr.mxu0 0.0
    %875 = vmatpush1.msra.mxu0 0.0
    %876 = vmatprep.subr.mxu0 0.0
    %877 = vmatpush1.msra.mxu0 0.0
    %878 = vmatprep.subr.mxu0 0.0
    %879 = vmatpush1.msra.mxu0 0.0
    %880 = vmatprep.subr.mxu0 0.0
    %881 = vmatpush1.msra.mxu0 0.0
    %882 = vmatprep.subr.mxu0 0.0
    %883 = vmatpush1.msra.mxu0 0.0
    %884 = vmatprep.subr.mxu0 0.0
    %885 = vmatpush1.msra.mxu0 0.0
    %886 = vmatprep.subr.mxu0 0.0
    %887 = vmatpush1.msra.mxu0 0.0
    %888 = vmatprep.subr.mxu0 0.0
    %889 = vmatpush1.msra.mxu0 0.0
    %890 = vmatprep.subr.mxu0 0.0
    %891 = vmatpush1.msra.mxu0 0.0
    %892 = vmatprep.subr.mxu0 0.0
    %893 = vmatpush1.msra.mxu0 0.0
    %894 = vmatprep.subr.mxu0 0.0
    %895 = vmatpush1.msra.mxu0 0.0
    %896 = vmatprep.subr.mxu0 0.0
    %897 = vmatpush1.msra.mxu0 0.0
    %898 = vmatprep.subr.mxu0 0.0
    %899 = vmatpush1.msra.mxu0 0.0
    %900 = vmatprep.subr.mxu0 0.0
    %901 = vmatpush1.msra.mxu0 0.0
    %902 = vmatprep.mubr.f32.mxu0 0.0
    %903 = vmatmul.mubr.f32.gmra.mrb[0].mxu0 %v837
    %v904 = vpop.f32.mrb[0].mxu0
    %v905 = vadd.f32 %v502, %v904
    %v906 = vpop.f32.mrb[0].mxu0
    %v907 = vadd.f32 %v506, %v906
    %908 = vdwg.mxu0
    %909 = vmatprep.subr.mxu0 0.0
    %910 = vmatpush1.msra.mxu0 %v451
    %911 = vmatprep.subr.mxu0 0.0
    %912 = vmatpush1.msra.mxu0 %v454
    %913 = vmatprep.subr.mxu0 0.0
    %914 = vmatpush1.msra.mxu0 %v457
    %915 = vmatprep.subr.mxu0 0.0
    %916 = vmatpush1.msra.mxu0 %v460
    %917 = vmatprep.subr.mxu0 0.0
    %918 = vmatpush1.msra.mxu0 %v463
    %919 = vmatprep.subr.mxu0 0.0
    %920 = vmatpush1.msra.mxu0 %v466
    %921 = vmatprep.subr.mxu0 0.0
    %922 = vmatpush1.msra.mxu0 %v469
    %923 = vmatprep.subr.mxu0 0.0
    %924 = vmatpush1.msra.mxu0 %v472
    %925 = vmatprep.subr.mxu0 0.0
    %926 = vmatpush1.msra.mxu0 %v475
    %927 = vmatprep.subr.mxu0 0.0
    %928 = vmatpush1.msra.mxu0 %v478
    %929 = vmatprep.subr.mxu0 0.0
    %930 = vmatpush1.msra.mxu0 %v481
    %931 = vmatprep.subr.mxu0 0.0
    %932 = vmatpush1.msra.mxu0 %v484
    %933 = vmatprep.subr.mxu0 0.0
    %934 = vmatpush1.msra.mxu0 %v487
    %935 = vmatprep.subr.mxu0 0.0
    %936 = vmatpush1.msra.mxu0 %v490
    %937 = vmatprep.subr.mxu0 0.0
    %938 = vmatpush1.msra.mxu0 %v493
    %939 = vmatprep.subr.mxu0 0.0
    %940 = vmatpush1.msra.mxu0 %v496
    %941 = vmatprep.subr.mxu0 0.0
    %942 = vmatpush1.msra.mxu0 0.0
    %943 = vmatprep.subr.mxu0 0.0
    %944 = vmatpush1.msra.mxu0 0.0
    %945 = vmatprep.subr.mxu0 0.0
    %946 = vmatpush1.msra.mxu0 0.0
    %947 = vmatprep.subr.mxu0 0.0
    %948 = vmatpush1.msra.mxu0 0.0
    %949 = vmatprep.subr.mxu0 0.0
    %950 = vmatpush1.msra.mxu0 0.0
    %951 = vmatprep.subr.mxu0 0.0
    %952 = vmatpush1.msra.mxu0 0.0
    %953 = vmatprep.subr.mxu0 0.0
    %954 = vmatpush1.msra.mxu0 0.0
    %955 = vmatprep.subr.mxu0 0.0
    %956 = vmatpush1.msra.mxu0 0.0
    %957 = vmatprep.subr.mxu0 0.0
    %958 = vmatpush1.msra.mxu0 0.0
    %959 = vmatprep.subr.mxu0 0.0
    %960 = vmatpush1.msra.mxu0 0.0
    %961 = vmatprep.subr.mxu0 0.0
    %962 = vmatpush1.msra.mxu0 0.0
    %963 = vmatprep.subr.mxu0 0.0
    %964 = vmatpush1.msra.mxu0 0.0
    %965 = vmatprep.subr.mxu0 0.0
    %966 = vmatpush1.msra.mxu0 0.0
    %967 = vmatprep.subr.mxu0 0.0
    %968 = vmatpush1.msra.mxu0 0.0
    %969 = vmatprep.subr.mxu0 0.0
    %970 = vmatpush1.msra.mxu0 0.0
    %971 = vmatprep.subr.mxu0 0.0
    %972 = vmatpush1.msra.mxu0 0.0
    %973 = vmatprep.mubr.f32.mxu0 0.0
    %974 = vmatmul.mubr.f32.gmra.mrb[0].mxu0 %v837
    %v975 = vpop.f32.mrb[0].mxu0
    %v976 = vadd.f32 %v510, %v975
    %v977 = vpop.f32.mrb[0].mxu0
    %978 = vdwg.mxu0
    %v979 = vadd.f32 %v310, %v905
    %v980 = vxor.u32 %v979, 2147483648
    %v981 = vmul.f32 %v980, 1.442695
    %v982 = vpow.pop %v981
    %v983 = vadd.f32 %v982, 1.0
    %v984 = vrcp.pop %v983
    %v985 = vmul.f32 1.0, %v984
    %v986 = vadd.f32 %v312, %v907
    %v987 = vxor.u32 %v986, 2147483648
    %v988 = vmul.f32 %v987, 1.442695
    %v989 = vpow.pop %v988
    %v990 = vadd.f32 %v989, 1.0
    %v991 = vrcp.pop %v990
    %v992 = vmul.f32 1.0, %v991
    %v993 = vmul.f32 %v985, %v976
    %v994 = vadd.f32 %v421, %v993
    %v995 = vtanh.pop %v994
    %v996 = vsub.f32 1.0, %v992
    %v997 = vmul.f32 %v996, %v995
    %v998 = vmul.f32 %v992, %v837
    %v999 = vadd.f32 %v997, %v998
    %1000 = vmatprep.subr.mxu0 %v450
    %1001 = vmatpush1.msra.mxu0 %v449
    %1002 = vmatprep.subr.mxu0 %v453
    %1003 = vmatpush1.msra.mxu0 %v452
    %1004 = vmatprep.subr.mxu0 %v456
    %1005 = vmatpush1.msra.mxu0 %v455
    %1006 = vmatprep.subr.mxu0 %v459
    %1007 = vmatpush1.msra.mxu0 %v458
    %1008 = vmatprep.subr.mxu0 %v462
    %1009 = vmatpush1.msra.mxu0 %v461
    %1010 = vmatprep.subr.mxu0 %v465
    %1011 = vmatpush1.msra.mxu0 %v464
    %1012 = vmatprep.subr.mxu0 %v468
    %1013 = vmatpush1.msra.mxu0 %v467
    %1014 = vmatprep.subr.mxu0 %v471
    %1015 = vmatpush1.msra.mxu0 %v470
    %1016 = vmatprep.subr.mxu0 %v474
    %1017 = vmatpush1.msra.mxu0 %v473
    %1018 = vmatprep.subr.mxu0 %v477
    %1019 = vmatpush1.msra.mxu0 %v476
    %1020 = vmatprep.subr.mxu0 %v480
    %1021 = vmatpush1.msra.mxu0 %v479
    %1022 = vmatprep.subr.mxu0 %v483
    %1023 = vmatpush1.msra.mxu0 %v482
    %1024 = vmatprep.subr.mxu0 %v486
    %1025 = vmatpush1.msra.mxu0 %v485
    %1026 = vmatprep.subr.mxu0 %v489
    %1027 = vmatpush1.msra.mxu0 %v488
    %1028 = vmatprep.subr.mxu0 %v492
    %1029 = vmatpush1.msra.mxu0 %v491
    %1030 = vmatprep.subr.mxu0 %v495
    %1031 = vmatpush1.msra.mxu0 %v494
    %1032 = vmatprep.subr.mxu0 0.0
    %1033 = vmatpush1.msra.mxu0 0.0
    %1034 = vmatprep.subr.mxu0 0.0
    %1035 = vmatpush1.msra.mxu0 0.0
    %1036 = vmatprep.subr.mxu0 0.0
    %1037 = vmatpush1.msra.mxu0 0.0
    %1038 = vmatprep.subr.mxu0 0.0
    %1039 = vmatpush1.msra.mxu0 0.0
    %1040 = vmatprep.subr.mxu0 0.0
    %1041 = vmatpush1.msra.mxu0 0.0
    %1042 = vmatprep.subr.mxu0 0.0
    %1043 = vmatpush1.msra.mxu0 0.0
    %1044 = vmatprep.subr.mxu0 0.0
    %1045 = vmatpush1.msra.mxu0 0.0
    %1046 = vmatprep.subr.mxu0 0.0
    %1047 = vmatpush1.msra.mxu0 0.0
    %1048 = vmatprep.subr.mxu0 0.0
    %1049 = vmatpush1.msra.mxu0 0.0
    %1050 = vmatprep.subr.mxu0 0.0
    %1051 = vmatpush1.msra.mxu0 0.0
    %1052 = vmatprep.subr.mxu0 0.0
    %1053 = vmatpush1.msra.mxu0 0.0
    %1054 = vmatprep.subr.mxu0 0.0
    %1055 = vmatpush1.msra.mxu0 0.0
    %1056 = vmatprep.subr.mxu0 0.0
    %1057 = vmatpush1.msra.mxu0 0.0
    %1058 = vmatprep.subr.mxu0 0.0
    %1059 = vmatpush1.msra.mxu0 0.0
    %1060 = vmatprep.subr.mxu0 0.0
    %1061 = vmatpush1.msra.mxu0 0.0
    %1062 = vmatprep.subr.mxu0 0.0
    %1063 = vmatpush1.msra.mxu0 0.0
    %1064 = vmatprep.mubr.f32.mxu0 0.0
    %1065 = vmatmul.mubr.f32.gmra.mrb[0].mxu0 %v999
    %v1066 = vpop.f32.mrb[0].mxu0
    %v1067 = vadd.f32 %v502, %v1066
    %v1068 = vpop.f32.mrb[0].mxu0
    %v1069 = vadd.f32 %v506, %v1068
    %1070 = vdwg.mxu0
    %1071 = vmatprep.subr.mxu0 0.0
    %1072 = vmatpush1.msra.mxu0 %v451
    %1073 = vmatprep.subr.mxu0 0.0
    %1074 = vmatpush1.msra.mxu0 %v454
    %1075 = vmatprep.subr.mxu0 0.0
    %1076 = vmatpush1.msra.mxu0 %v457
    %1077 = vmatprep.subr.mxu0 0.0
    %1078 = vmatpush1.msra.mxu0 %v460
    %1079 = vmatprep.subr.mxu0 0.0
    %1080 = vmatpush1.msra.mxu0 %v463
    %1081 = vmatprep.subr.mxu0 0.0
    %1082 = vmatpush1.msra.mxu0 %v466
    %1083 = vmatprep.subr.mxu0 0.0
    %1084 = vmatpush1.msra.mxu0 %v469
    %1085 = vmatprep.subr.mxu0 0.0
    %1086 = vmatpush1.msra.mxu0 %v472
    %1087 = vmatprep.subr.mxu0 0.0
    %1088 = vmatpush1.msra.mxu0 %v475
    %1089 = vmatprep.subr.mxu0 0.0
    %1090 = vmatpush1.msra.mxu0 %v478
    %1091 = vmatprep.subr.mxu0 0.0
    %1092 = vmatpush1.msra.mxu0 %v481
    %1093 = vmatprep.subr.mxu0 0.0
    %1094 = vmatpush1.msra.mxu0 %v484
    %1095 = vmatprep.subr.mxu0 0.0
    %1096 = vmatpush1.msra.mxu0 %v487
    %1097 = vmatprep.subr.mxu0 0.0
    %1098 = vmatpush1.msra.mxu0 %v490
    %1099 = vmatprep.subr.mxu0 0.0
    %1100 = vmatpush1.msra.mxu0 %v493
    %1101 = vmatprep.subr.mxu0 0.0
    %1102 = vmatpush1.msra.mxu0 %v496
    %1103 = vmatprep.subr.mxu0 0.0
    %1104 = vmatpush1.msra.mxu0 0.0
    %1105 = vmatprep.subr.mxu0 0.0
    %1106 = vmatpush1.msra.mxu0 0.0
    %1107 = vmatprep.subr.mxu0 0.0
    %1108 = vmatpush1.msra.mxu0 0.0
    %1109 = vmatprep.subr.mxu0 0.0
    %1110 = vmatpush1.msra.mxu0 0.0
    %1111 = vmatprep.subr.mxu0 0.0
    %1112 = vmatpush1.msra.mxu0 0.0
    %1113 = vmatprep.subr.mxu0 0.0
    %1114 = vmatpush1.msra.mxu0 0.0
    %1115 = vmatprep.subr.mxu0 0.0
    %1116 = vmatpush1.msra.mxu0 0.0
    %1117 = vmatprep.subr.mxu0 0.0
    %1118 = vmatpush1.msra.mxu0 0.0
    %1119 = vmatprep.subr.mxu0 0.0
    %1120 = vmatpush1.msra.mxu0 0.0
    %1121 = vmatprep.subr.mxu0 0.0
    %1122 = vmatpush1.msra.mxu0 0.0
    %1123 = vmatprep.subr.mxu0 0.0
    %1124 = vmatpush1.msra.mxu0 0.0
    %1125 = vmatprep.subr.mxu0 0.0
    %1126 = vmatpush1.msra.mxu0 0.0
    %1127 = vmatprep.subr.mxu0 0.0
    %1128 = vmatpush1.msra.mxu0 0.0
    %1129 = vmatprep.subr.mxu0 0.0
    %1130 = vmatpush1.msra.mxu0 0.0
    %1131 = vmatprep.subr.mxu0 0.0
    %1132 = vmatpush1.msra.mxu0 0.0
    %1133 = vmatprep.subr.mxu0 0.0
    %1134 = vmatpush1.msra.mxu0 0.0
    %1135 = vmatprep.mubr.f32.mxu0 0.0
    %1136 = vmatmul.mubr.f32.gmra.mrb[0].mxu0 %v999
    %v1137 = vpop.f32.mrb[0].mxu0
    %v1138 = vadd.f32 %v510, %v1137
    %v1139 = vpop.f32.mrb[0].mxu0
    %1140 = vdwg.mxu0
    %v1141 = vadd.f32 %v316, %v1067
    %v1142 = vxor.u32 %v1141, 2147483648
    %v1143 = vmul.f32 %v1142, 1.442695
    %v1144 = vpow.pop %v1143
    %v1145 = vadd.f32 %v1144, 1.0
    %v1146 = vrcp.pop %v1145
    %v1147 = vmul.f32 1.0, %v1146
    %v1148 = vadd.f32 %v318, %v1069
    %v1149 = vxor.u32 %v1148, 2147483648
    %v1150 = vmul.f32 %v1149, 1.442695
    %v1151 = vpow.pop %v1150
    %v1152 = vadd.f32 %v1151, 1.0
    %v1153 = vrcp.pop %v1152
    %v1154 = vmul.f32 1.0, %v1153
    %v1155 = vmul.f32 %v1147, %v1138
    %v1156 = vadd.f32 %v426, %v1155
    %v1157 = vtanh.pop %v1156
    %v1158 = vsub.f32 1.0, %v1154
    %v1159 = vmul.f32 %v1158, %v1157
    %v1160 = vmul.f32 %v1154, %v999
    %v1161 = vadd.f32 %v1159, %v1160
    %1162 = vmatprep.subr.mxu0 %v450
    %1163 = vmatpush1.msra.mxu0 %v449
    %1164 = vmatprep.subr.mxu0 %v453
    %1165 = vmatpush1.msra.mxu0 %v452
    %1166 = vmatprep.subr.mxu0 %v456
    %1167 = vmatpush1.msra.mxu0 %v455
    %1168 = vmatprep.subr.mxu0 %v459
    %1169 = vmatpush1.msra.mxu0 %v458
    %1170 = vmatprep.subr.mxu0 %v462
    %1171 = vmatpush1.msra.mxu0 %v461
    %1172 = vmatprep.subr.mxu0 %v465
    %1173 = vmatpush1.msra.mxu0 %v464
    %1174 = vmatprep.subr.mxu0 %v468
    %1175 = vmatpush1.msra.mxu0 %v467
    %1176 = vmatprep.subr.mxu0 %v471
    %1177 = vmatpush1.msra.mxu0 %v470
    %1178 = vmatprep.subr.mxu0 %v474
    %1179 = vmatpush1.msra.mxu0 %v473
    %1180 = vmatprep.subr.mxu0 %v477
    %1181 = vmatpush1.msra.mxu0 %v476
    %1182 = vmatprep.subr.mxu0 %v480
    %1183 = vmatpush1.msra.mxu0 %v479
    %1184 = vmatprep.subr.mxu0 %v483
    %1185 = vmatpush1.msra.mxu0 %v482
    %1186 = vmatprep.subr.mxu0 %v486
    %1187 = vmatpush1.msra.mxu0 %v485
    %1188 = vmatprep.subr.mxu0 %v489
    %1189 = vmatpush1.msra.mxu0 %v488
    %1190 = vmatprep.subr.mxu0 %v492
    %1191 = vmatpush1.msra.mxu0 %v491
    %1192 = vmatprep.subr.mxu0 %v495
    %1193 = vmatpush1.msra.mxu0 %v494
    %1194 = vmatprep.subr.mxu0 0.0
    %1195 = vmatpush1.msra.mxu0 0.0
    %1196 = vmatprep.subr.mxu0 0.0
    %1197 = vmatpush1.msra.mxu0 0.0
    %1198 = vmatprep.subr.mxu0 0.0
    %1199 = vmatpush1.msra.mxu0 0.0
    %1200 = vmatprep.subr.mxu0 0.0
    %1201 = vmatpush1.msra.mxu0 0.0
    %1202 = vmatprep.subr.mxu0 0.0
    %1203 = vmatpush1.msra.mxu0 0.0
    %1204 = vmatprep.subr.mxu0 0.0
    %1205 = vmatpush1.msra.mxu0 0.0
    %1206 = vmatprep.subr.mxu0 0.0
    %1207 = vmatpush1.msra.mxu0 0.0
    %1208 = vmatprep.subr.mxu0 0.0
    %1209 = vmatpush1.msra.mxu0 0.0
    %1210 = vmatprep.subr.mxu0 0.0
    %1211 = vmatpush1.msra.mxu0 0.0
    %1212 = vmatprep.subr.mxu0 0.0
    %1213 = vmatpush1.msra.mxu0 0.0
    %1214 = vmatprep.subr.mxu0 0.0
    %1215 = vmatpush1.msra.mxu0 0.0
    %1216 = vmatprep.subr.mxu0 0.0
    %1217 = vmatpush1.msra.mxu0 0.0
    %1218 = vmatprep.subr.mxu0 0.0
    %1219 = vmatpush1.msra.mxu0 0.0
    %1220 = vmatprep.subr.mxu0 0.0
    %1221 = vmatpush1.msra.mxu0 0.0
    %1222 = vmatprep.subr.mxu0 0.0
    %1223 = vmatpush1.msra.mxu0 0.0
    %1224 = vmatprep.subr.mxu0 0.0
    %1225 = vmatpush1.msra.mxu0 0.0
    %1226 = vmatprep.mubr.f32.mxu0 0.0
    %1227 = vmatmul.mubr.f32.gmra.mrb[0].mxu0 %v1161
    %v1228 = vpop.f32.mrb[0].mxu0
    %v1229 = vadd.f32 %v502, %v1228
    %v1230 = vpop.f32.mrb[0].mxu0
    %v1231 = vadd.f32 %v506, %v1230
    %1232 = vdwg.mxu0
    %1233 = vmatprep.subr.mxu0 0.0
    %1234 = vmatpush1.msra.mxu0 %v451
    %1235 = vmatprep.subr.mxu0 0.0
    %1236 = vmatpush1.msra.mxu0 %v454
    %1237 = vmatprep.subr.mxu0 0.0
    %1238 = vmatpush1.msra.mxu0 %v457
    %1239 = vmatprep.subr.mxu0 0.0
    %1240 = vmatpush1.msra.mxu0 %v460
    %1241 = vmatprep.subr.mxu0 0.0
    %1242 = vmatpush1.msra.mxu0 %v463
    %1243 = vmatprep.subr.mxu0 0.0
    %1244 = vmatpush1.msra.mxu0 %v466
    %1245 = vmatprep.subr.mxu0 0.0
    %1246 = vmatpush1.msra.mxu0 %v469
    %1247 = vmatprep.subr.mxu0 0.0
    %1248 = vmatpush1.msra.mxu0 %v472
    %1249 = vmatprep.subr.mxu0 0.0
    %1250 = vmatpush1.msra.mxu0 %v475
    %1251 = vmatprep.subr.mxu0 0.0
    %1252 = vmatpush1.msra.mxu0 %v478
    %1253 = vmatprep.subr.mxu0 0.0
    %1254 = vmatpush1.msra.mxu0 %v481
    %1255 = vmatprep.subr.mxu0 0.0
    %1256 = vmatpush1.msra.mxu0 %v484
    %1257 = vmatprep.subr.mxu0 0.0
    %1258 = vmatpush1.msra.mxu0 %v487
    %1259 = vmatprep.subr.mxu0 0.0
    %1260 = vmatpush1.msra.mxu0 %v490
    %1261 = vmatprep.subr.mxu0 0.0
    %1262 = vmatpush1.msra.mxu0 %v493
    %1263 = vmatprep.subr.mxu0 0.0
    %1264 = vmatpush1.msra.mxu0 %v496
    %1265 = vmatprep.subr.mxu0 0.0
    %1266 = vmatpush1.msra.mxu0 0.0
    %1267 = vmatprep.subr.mxu0 0.0
    %1268 = vmatpush1.msra.mxu0 0.0
    %1269 = vmatprep.subr.mxu0 0.0
    %1270 = vmatpush1.msra.mxu0 0.0
    %1271 = vmatprep.subr.mxu0 0.0
    %1272 = vmatpush1.msra.mxu0 0.0
    %1273 = vmatprep.subr.mxu0 0.0
    %1274 = vmatpush1.msra.mxu0 0.0
    %1275 = vmatprep.subr.mxu0 0.0
    %1276 = vmatpush1.msra.mxu0 0.0
    %1277 = vmatprep.subr.mxu0 0.0
    %1278 = vmatpush1.msra.mxu0 0.0
    %1279 = vmatprep.subr.mxu0 0.0
    %1280 = vmatpush1.msra.mxu0 0.0
    %1281 = vmatprep.subr.mxu0 0.0
    %1282 = vmatpush1.msra.mxu0 0.0
    %1283 = vmatprep.subr.mxu0 0.0
    %1284 = vmatpush1.msra.mxu0 0.0
    %1285 = vmatprep.subr.mxu0 0.0
    %1286 = vmatpush1.msra.mxu0 0.0
    %1287 = vmatprep.subr.mxu0 0.0
    %1288 = vmatpush1.msra.mxu0 0.0
    %1289 = vmatprep.subr.mxu0 0.0
    %1290 = vmatpush1.msra.mxu0 0.0
    %1291 = vmatprep.subr.mxu0 0.0
    %1292 = vmatpush1.msra.mxu0 0.0
    %1293 = vmatprep.subr.mxu0 0.0
    %1294 = vmatpush1.msra.mxu0 0.0
    %1295 = vmatprep.subr.mxu0 0.0
    %1296 = vmatpush1.msra.mxu0 0.0
    %1297 = vmatprep.mubr.f32.mxu0 0.0
    %1298 = vmatmul.mubr.f32.gmra.mrb[0].mxu0 %v1161
    %v1299 = vpop.f32.mrb[0].mxu0
    %v1300 = vadd.f32 %v510, %v1299
    %v1301 = vpop.f32.mrb[0].mxu0
    %1302 = vdwg.mxu0
    %v1303 = vadd.f32 %v322, %v1229
    %v1304 = vxor.u32 %v1303, 2147483648
    %v1305 = vmul.f32 %v1304, 1.442695
    %v1306 = vpow.pop %v1305
    %v1307 = vadd.f32 %v1306, 1.0
    %v1308 = vrcp.pop %v1307
    %v1309 = vmul.f32 1.0, %v1308
    %v1310 = vadd.f32 %v324, %v1231
    %v1311 = vxor.u32 %v1310, 2147483648
    %v1312 = vmul.f32 %v1311, 1.442695
    %v1313 = vpow.pop %v1312
    %v1314 = vadd.f32 %v1313, 1.0
    %v1315 = vrcp.pop %v1314
    %v1316 = vmul.f32 1.0, %v1315
    %v1317 = vmul.f32 %v1309, %v1300
    %v1318 = vadd.f32 %v431, %v1317
    %v1319 = vtanh.pop %v1318
    %v1320 = vsub.f32 1.0, %v1316
    %v1321 = vmul.f32 %v1320, %v1319
    %v1322 = vmul.f32 %v1316, %v1161
    %v1323 = vadd.f32 %v1321, %v1322
    %1324 = vmatprep.subr.mxu0 %v450
    %1325 = vmatpush1.msra.mxu0 %v449
    %1326 = vmatprep.subr.mxu0 %v453
    %1327 = vmatpush1.msra.mxu0 %v452
    %1328 = vmatprep.subr.mxu0 %v456
    %1329 = vmatpush1.msra.mxu0 %v455
    %1330 = vmatprep.subr.mxu0 %v459
    %1331 = vmatpush1.msra.mxu0 %v458
    %1332 = vmatprep.subr.mxu0 %v462
    %1333 = vmatpush1.msra.mxu0 %v461
    %1334 = vmatprep.subr.mxu0 %v465
    %1335 = vmatpush1.msra.mxu0 %v464
    %1336 = vmatprep.subr.mxu0 %v468
    %1337 = vmatpush1.msra.mxu0 %v467
    %1338 = vmatprep.subr.mxu0 %v471
    %1339 = vmatpush1.msra.mxu0 %v470
    %1340 = vmatprep.subr.mxu0 %v474
    %1341 = vmatpush1.msra.mxu0 %v473
    %1342 = vmatprep.subr.mxu0 %v477
    %1343 = vmatpush1.msra.mxu0 %v476
    %1344 = vmatprep.subr.mxu0 %v480
    %1345 = vmatpush1.msra.mxu0 %v479
    %1346 = vmatprep.subr.mxu0 %v483
    %1347 = vmatpush1.msra.mxu0 %v482
    %1348 = vmatprep.subr.mxu0 %v486
    %1349 = vmatpush1.msra.mxu0 %v485
    %1350 = vmatprep.subr.mxu0 %v489
    %1351 = vmatpush1.msra.mxu0 %v488
    %1352 = vmatprep.subr.mxu0 %v492
    %1353 = vmatpush1.msra.mxu0 %v491
    %1354 = vmatprep.subr.mxu0 %v495
    %1355 = vmatpush1.msra.mxu0 %v494
    %1356 = vmatprep.subr.mxu0 0.0
    %1357 = vmatpush1.msra.mxu0 0.0
    %1358 = vmatprep.subr.mxu0 0.0
    %1359 = vmatpush1.msra.mxu0 0.0
    %1360 = vmatprep.subr.mxu0 0.0
    %1361 = vmatpush1.msra.mxu0 0.0
    %1362 = vmatprep.subr.mxu0 0.0
    %1363 = vmatpush1.msra.mxu0 0.0
    %1364 = vmatprep.subr.mxu0 0.0
    %1365 = vmatpush1.msra.mxu0 0.0
    %1366 = vmatprep.subr.mxu0 0.0
    %1367 = vmatpush1.msra.mxu0 0.0
    %1368 = vmatprep.subr.mxu0 0.0
    %1369 = vmatpush1.msra.mxu0 0.0
    %1370 = vmatprep.subr.mxu0 0.0
    %1371 = vmatpush1.msra.mxu0 0.0
    %1372 = vmatprep.subr.mxu0 0.0
    %1373 = vmatpush1.msra.mxu0 0.0
    %1374 = vmatprep.subr.mxu0 0.0
    %1375 = vmatpush1.msra.mxu0 0.0
    %1376 = vmatprep.subr.mxu0 0.0
    %1377 = vmatpush1.msra.mxu0 0.0
    %1378 = vmatprep.subr.mxu0 0.0
    %1379 = vmatpush1.msra.mxu0 0.0
    %1380 = vmatprep.subr.mxu0 0.0
    %1381 = vmatpush1.msra.mxu0 0.0
    %1382 = vmatprep.subr.mxu0 0.0
    %1383 = vmatpush1.msra.mxu0 0.0
    %1384 = vmatprep.subr.mxu0 0.0
    %1385 = vmatpush1.msra.mxu0 0.0
    %1386 = vmatprep.subr.mxu0 0.0
    %1387 = vmatpush1.msra.mxu0 0.0
    %1388 = vmatprep.mubr.f32.mxu0 0.0
    %1389 = vmatmul.mubr.f32.gmra.mrb[0].mxu0 %v1323
    %v1390 = vpop.f32.mrb[0].mxu0
    %v1391 = vadd.f32 %v502, %v1390
    %v1392 = vpop.f32.mrb[0].mxu0
    %v1393 = vadd.f32 %v506, %v1392
    %1394 = vdwg.mxu0
    %1395 = vmatprep.subr.mxu0 0.0
    %1396 = vmatpush1.msra.mxu0 %v451
    %1397 = vmatprep.subr.mxu0 0.0
    %1398 = vmatpush1.msra.mxu0 %v454
    %1399 = vmatprep.subr.mxu0 0.0
    %1400 = vmatpush1.msra.mxu0 %v457
    %1401 = vmatprep.subr.mxu0 0.0
    %1402 = vmatpush1.msra.mxu0 %v460
    %1403 = vmatprep.subr.mxu0 0.0
    %1404 = vmatpush1.msra.mxu0 %v463
    %1405 = vmatprep.subr.mxu0 0.0
    %1406 = vmatpush1.msra.mxu0 %v466
    %1407 = vmatprep.subr.mxu0 0.0
    %1408 = vmatpush1.msra.mxu0 %v469
    %1409 = vmatprep.subr.mxu0 0.0
    %1410 = vmatpush1.msra.mxu0 %v472
    %1411 = vmatprep.subr.mxu0 0.0
    %1412 = vmatpush1.msra.mxu0 %v475
    %1413 = vmatprep.subr.mxu0 0.0
    %1414 = vmatpush1.msra.mxu0 %v478
    %1415 = vmatprep.subr.mxu0 0.0
    %1416 = vmatpush1.msra.mxu0 %v481
    %1417 = vmatprep.subr.mxu0 0.0
    %1418 = vmatpush1.msra.mxu0 %v484
    %1419 = vmatprep.subr.mxu0 0.0
    %1420 = vmatpush1.msra.mxu0 %v487
    %1421 = vmatprep.subr.mxu0 0.0
    %1422 = vmatpush1.msra.mxu0 %v490
    %1423 = vmatprep.subr.mxu0 0.0
    %1424 = vmatpush1.msra.mxu0 %v493
    %1425 = vmatprep.subr.mxu0 0.0
    %1426 = vmatpush1.msra.mxu0 %v496
    %1427 = vmatprep.subr.mxu0 0.0
    %1428 = vmatpush1.msra.mxu0 0.0
    %1429 = vmatprep.subr.mxu0 0.0
    %1430 = vmatpush1.msra.mxu0 0.0
    %1431 = vmatprep.subr.mxu0 0.0
    %1432 = vmatpush1.msra.mxu0 0.0
    %1433 = vmatprep.subr.mxu0 0.0
    %1434 = vmatpush1.msra.mxu0 0.0
    %1435 = vmatprep.subr.mxu0 0.0
    %1436 = vmatpush1.msra.mxu0 0.0
    %1437 = vmatprep.subr.mxu0 0.0
    %1438 = vmatpush1.msra.mxu0 0.0
    %1439 = vmatprep.subr.mxu0 0.0
    %1440 = vmatpush1.msra.mxu0 0.0
    %1441 = vmatprep.subr.mxu0 0.0
    %1442 = vmatpush1.msra.mxu0 0.0
    %1443 = vmatprep.subr.mxu0 0.0
    %1444 = vmatpush1.msra.mxu0 0.0
    %1445 = vmatprep.subr.mxu0 0.0
    %1446 = vmatpush1.msra.mxu0 0.0
    %1447 = vmatprep.subr.mxu0 0.0
    %1448 = vmatpush1.msra.mxu0 0.0
    %1449 = vmatprep.subr.mxu0 0.0
    %1450 = vmatpush1.msra.mxu0 0.0
    %1451 = vmatprep.subr.mxu0 0.0
    %1452 = vmatpush1.msra.mxu0 0.0
    %1453 = vmatprep.subr.mxu0 0.0
    %1454 = vmatpush1.msra.mxu0 0.0
    %1455 = vmatprep.subr.mxu0 0.0
    %1456 = vmatpush1.msra.mxu0 0.0
    %1457 = vmatprep.subr.mxu0 0.0
    %1458 = vmatpush1.msra.mxu0 0.0
    %1459 = vmatprep.mubr.f32.mxu0 0.0
    %1460 = vmatmul.mubr.f32.gmra.mrb[0].mxu0 %v1323
    %v1461 = vpop.f32.mrb[0].mxu0
    %v1462 = vadd.f32 %v510, %v1461
    %v1463 = vpop.f32.mrb[0].mxu0
    %1464 = vdwg.mxu0
    %v1465 = vadd.f32 %v328, %v1391
    %v1466 = vxor.u32 %v1465, 2147483648
    %v1467 = vmul.f32 %v1466, 1.442695
    %v1468 = vpow.pop %v1467
    %v1469 = vadd.f32 %v1468, 1.0
    %v1470 = vrcp.pop %v1469
    %v1471 = vmul.f32 1.0, %v1470
    %v1472 = vadd.f32 %v330, %v1393
    %v1473 = vxor.u32 %v1472, 2147483648
    %v1474 = vmul.f32 %v1473, 1.442695
    %v1475 = vpow.pop %v1474
    %v1476 = vadd.f32 %v1475, 1.0
    %v1477 = vrcp.pop %v1476
    %v1478 = vmul.f32 1.0, %v1477
    %v1479 = vmul.f32 %v1471, %v1462
    %v1480 = vadd.f32 %v436, %v1479
    %v1481 = vtanh.pop %v1480
    %v1482 = vsub.f32 1.0, %v1478
    %v1483 = vmul.f32 %v1482, %v1481
    %v1484 = vmul.f32 %v1478, %v1323
    %v1485 = vadd.f32 %v1483, %v1484
    %1486 = vmatprep.subr.mxu0 %v450
    %1487 = vmatpush1.msra.mxu0 %v449
    %1488 = vmatprep.subr.mxu0 %v453
    %1489 = vmatpush1.msra.mxu0 %v452
    %1490 = vmatprep.subr.mxu0 %v456
    %1491 = vmatpush1.msra.mxu0 %v455
    %1492 = vmatprep.subr.mxu0 %v459
    %1493 = vmatpush1.msra.mxu0 %v458
    %1494 = vmatprep.subr.mxu0 %v462
    %1495 = vmatpush1.msra.mxu0 %v461
    %1496 = vmatprep.subr.mxu0 %v465
    %1497 = vmatpush1.msra.mxu0 %v464
    %1498 = vmatprep.subr.mxu0 %v468
    %1499 = vmatpush1.msra.mxu0 %v467
    %1500 = vmatprep.subr.mxu0 %v471
    %1501 = vmatpush1.msra.mxu0 %v470
    %1502 = vmatprep.subr.mxu0 %v474
    %1503 = vmatpush1.msra.mxu0 %v473
    %1504 = vmatprep.subr.mxu0 %v477
    %1505 = vmatpush1.msra.mxu0 %v476
    %1506 = vmatprep.subr.mxu0 %v480
    %1507 = vmatpush1.msra.mxu0 %v479
    %1508 = vmatprep.subr.mxu0 %v483
    %1509 = vmatpush1.msra.mxu0 %v482
    %1510 = vmatprep.subr.mxu0 %v486
    %1511 = vmatpush1.msra.mxu0 %v485
    %1512 = vmatprep.subr.mxu0 %v489
    %1513 = vmatpush1.msra.mxu0 %v488
    %1514 = vmatprep.subr.mxu0 %v492
    %1515 = vmatpush1.msra.mxu0 %v491
    %1516 = vmatprep.subr.mxu0 %v495
    %1517 = vmatpush1.msra.mxu0 %v494
    %1518 = vmatprep.subr.mxu0 0.0
    %1519 = vmatpush1.msra.mxu0 0.0
    %1520 = vmatprep.subr.mxu0 0.0
    %1521 = vmatpush1.msra.mxu0 0.0
    %1522 = vmatprep.subr.mxu0 0.0
    %1523 = vmatpush1.msra.mxu0 0.0
    %1524 = vmatprep.subr.mxu0 0.0
    %1525 = vmatpush1.msra.mxu0 0.0
    %1526 = vmatprep.subr.mxu0 0.0
    %1527 = vmatpush1.msra.mxu0 0.0
    %1528 = vmatprep.subr.mxu0 0.0
    %1529 = vmatpush1.msra.mxu0 0.0
    %1530 = vmatprep.subr.mxu0 0.0
    %1531 = vmatpush1.msra.mxu0 0.0
    %1532 = vmatprep.subr.mxu0 0.0
    %1533 = vmatpush1.msra.mxu0 0.0
    %1534 = vmatprep.subr.mxu0 0.0
    %1535 = vmatpush1.msra.mxu0 0.0
    %1536 = vmatprep.subr.mxu0 0.0
    %1537 = vmatpush1.msra.mxu0 0.0
    %1538 = vmatprep.subr.mxu0 0.0
    %1539 = vmatpush1.msra.mxu0 0.0
    %1540 = vmatprep.subr.mxu0 0.0
    %1541 = vmatpush1.msra.mxu0 0.0
    %1542 = vmatprep.subr.mxu0 0.0
    %1543 = vmatpush1.msra.mxu0 0.0
    %1544 = vmatprep.subr.mxu0 0.0
    %1545 = vmatpush1.msra.mxu0 0.0
    %1546 = vmatprep.subr.mxu0 0.0
    %1547 = vmatpush1.msra.mxu0 0.0
    %1548 = vmatprep.subr.mxu0 0.0
    %1549 = vmatpush1.msra.mxu0 0.0
    %1550 = vmatprep.mubr.f32.mxu0 0.0
    %1551 = vmatmul.mubr.f32.gmra.mrb[0].mxu0 %v1485
    %v1552 = vpop.f32.mrb[0].mxu0
    %v1553 = vadd.f32 %v502, %v1552
    %v1554 = vpop.f32.mrb[0].mxu0
    %v1555 = vadd.f32 %v506, %v1554
    %1556 = vdwg.mxu0
    %1557 = vmatprep.subr.mxu0 0.0
    %1558 = vmatpush1.msra.mxu0 %v451
    %1559 = vmatprep.subr.mxu0 0.0
    %1560 = vmatpush1.msra.mxu0 %v454
    %1561 = vmatprep.subr.mxu0 0.0
    %1562 = vmatpush1.msra.mxu0 %v457
    %1563 = vmatprep.subr.mxu0 0.0
    %1564 = vmatpush1.msra.mxu0 %v460
    %1565 = vmatprep.subr.mxu0 0.0
    %1566 = vmatpush1.msra.mxu0 %v463
    %1567 = vmatprep.subr.mxu0 0.0
    %1568 = vmatpush1.msra.mxu0 %v466
    %1569 = vmatprep.subr.mxu0 0.0
    %1570 = vmatpush1.msra.mxu0 %v469
    %1571 = vmatprep.subr.mxu0 0.0
    %1572 = vmatpush1.msra.mxu0 %v472
    %1573 = vmatprep.subr.mxu0 0.0
    %1574 = vmatpush1.msra.mxu0 %v475
    %1575 = vmatprep.subr.mxu0 0.0
    %1576 = vmatpush1.msra.mxu0 %v478
    %1577 = vmatprep.subr.mxu0 0.0
    %1578 = vmatpush1.msra.mxu0 %v481
    %1579 = vmatprep.subr.mxu0 0.0
    %1580 = vmatpush1.msra.mxu0 %v484
    %1581 = vmatprep.subr.mxu0 0.0
    %1582 = vmatpush1.msra.mxu0 %v487
    %1583 = vmatprep.subr.mxu0 0.0
    %1584 = vmatpush1.msra.mxu0 %v490
    %1585 = vmatprep.subr.mxu0 0.0
    %1586 = vmatpush1.msra.mxu0 %v493
    %1587 = vmatprep.subr.mxu0 0.0
    %1588 = vmatpush1.msra.mxu0 %v496
    %1589 = vmatprep.subr.mxu0 0.0
    %1590 = vmatpush1.msra.mxu0 0.0
    %1591 = vmatprep.subr.mxu0 0.0
    %1592 = vmatpush1.msra.mxu0 0.0
    %1593 = vmatprep.subr.mxu0 0.0
    %1594 = vmatpush1.msra.mxu0 0.0
    %1595 = vmatprep.subr.mxu0 0.0
    %1596 = vmatpush1.msra.mxu0 0.0
    %1597 = vmatprep.subr.mxu0 0.0
    %1598 = vmatpush1.msra.mxu0 0.0
    %1599 = vmatprep.subr.mxu0 0.0
    %1600 = vmatpush1.msra.mxu0 0.0
    %1601 = vmatprep.subr.mxu0 0.0
    %1602 = vmatpush1.msra.mxu0 0.0
    %1603 = vmatprep.subr.mxu0 0.0
    %1604 = vmatpush1.msra.mxu0 0.0
    %1605 = vmatprep.subr.mxu0 0.0
    %1606 = vmatpush1.msra.mxu0 0.0
    %1607 = vmatprep.subr.mxu0 0.0
    %1608 = vmatpush1.msra.mxu0 0.0
    %1609 = vmatprep.subr.mxu0 0.0
    %1610 = vmatpush1.msra.mxu0 0.0
    %1611 = vmatprep.subr.mxu0 0.0
    %1612 = vmatpush1.msra.mxu0 0.0
    %1613 = vmatprep.subr.mxu0 0.0
    %1614 = vmatpush1.msra.mxu0 0.0
    %1615 = vmatprep.subr.mxu0 0.0
    %1616 = vmatpush1.msra.mxu0 0.0
    %1617 = vmatprep.subr.mxu0 0.0
    %1618 = vmatpush1.msra.mxu0 0.0
    %1619 = vmatprep.subr.mxu0 0.0
    %1620 = vmatpush1.msra.mxu0 0.0
    %1621 = vmatprep.mubr.f32.mxu0 0.0
    %1622 = vmatmul.mubr.f32.gmra.mrb[0].mxu0 %v1485
    %v1623 = vpop.f32.mrb[0].mxu0
    %v1624 = vadd.f32 %v510, %v1623
    %v1625 = vpop.f32.mrb[0].mxu0
    %1626 = vdwg.mxu0
    %v1627 = vadd.f32 %v334, %v1553
    %v1628 = vxor.u32 %v1627, 2147483648
    %v1629 = vmul.f32 %v1628, 1.442695
    %v1630 = vpow.pop %v1629
    %v1631 = vadd.f32 %v1630, 1.0
    %v1632 = vrcp.pop %v1631
    %v1633 = vmul.f32 1.0, %v1632
    %v1634 = vadd.f32 %v336, %v1555
    %v1635 = vxor.u32 %v1634, 2147483648
    %v1636 = vmul.f32 %v1635, 1.442695
    %v1637 = vpow.pop %v1636
    %v1638 = vadd.f32 %v1637, 1.0
    %v1639 = vrcp.pop %v1638
    %v1640 = vmul.f32 1.0, %v1639
    %v1641 = vmul.f32 %v1633, %v1624
    %v1642 = vadd.f32 %v441, %v1641
    %v1643 = vtanh.pop %v1642
    %v1644 = vsub.f32 1.0, %v1640
    %v1645 = vmul.f32 %v1644, %v1643
    %v1646 = vmul.f32 %v1640, %v1485
    %v1647 = vadd.f32 %v1645, %v1646
    %1648 = vmatprep.subr.mxu0 %v450
    %1649 = vmatpush1.msra.mxu0 %v449
    %1650 = vmatprep.subr.mxu0 %v453
    %1651 = vmatpush1.msra.mxu0 %v452
    %1652 = vmatprep.subr.mxu0 %v456
    %1653 = vmatpush1.msra.mxu0 %v455
    %1654 = vmatprep.subr.mxu0 %v459
    %1655 = vmatpush1.msra.mxu0 %v458
    %1656 = vmatprep.subr.mxu0 %v462
    %1657 = vmatpush1.msra.mxu0 %v461
    %1658 = vmatprep.subr.mxu0 %v465
    %1659 = vmatpush1.msra.mxu0 %v464
    %1660 = vmatprep.subr.mxu0 %v468
    %1661 = vmatpush1.msra.mxu0 %v467
    %1662 = vmatprep.subr.mxu0 %v471
    %1663 = vmatpush1.msra.mxu0 %v470
    %1664 = vmatprep.subr.mxu0 %v474
    %1665 = vmatpush1.msra.mxu0 %v473
    %1666 = vmatprep.subr.mxu0 %v477
    %1667 = vmatpush1.msra.mxu0 %v476
    %1668 = vmatprep.subr.mxu0 %v480
    %1669 = vmatpush1.msra.mxu0 %v479
    %1670 = vmatprep.subr.mxu0 %v483
    %1671 = vmatpush1.msra.mxu0 %v482
    %1672 = vmatprep.subr.mxu0 %v486
    %1673 = vmatpush1.msra.mxu0 %v485
    %1674 = vmatprep.subr.mxu0 %v489
    %1675 = vmatpush1.msra.mxu0 %v488
    %1676 = vmatprep.subr.mxu0 %v492
    %1677 = vmatpush1.msra.mxu0 %v491
    %1678 = vmatprep.subr.mxu0 %v495
    %1679 = vmatpush1.msra.mxu0 %v494
    %1680 = vmatprep.subr.mxu0 0.0
    %1681 = vmatpush1.msra.mxu0 0.0
    %1682 = vmatprep.subr.mxu0 0.0
    %1683 = vmatpush1.msra.mxu0 0.0
    %1684 = vmatprep.subr.mxu0 0.0
    %1685 = vmatpush1.msra.mxu0 0.0
    %1686 = vmatprep.subr.mxu0 0.0
    %1687 = vmatpush1.msra.mxu0 0.0
    %1688 = vmatprep.subr.mxu0 0.0
    %1689 = vmatpush1.msra.mxu0 0.0
    %1690 = vmatprep.subr.mxu0 0.0
    %1691 = vmatpush1.msra.mxu0 0.0
    %1692 = vmatprep.subr.mxu0 0.0
    %1693 = vmatpush1.msra.mxu0 0.0
    %1694 = vmatprep.subr.mxu0 0.0
    %1695 = vmatpush1.msra.mxu0 0.0
    %1696 = vmatprep.subr.mxu0 0.0
    %1697 = vmatpush1.msra.mxu0 0.0
    %1698 = vmatprep.subr.mxu0 0.0
    %1699 = vmatpush1.msra.mxu0 0.0
    %1700 = vmatprep.subr.mxu0 0.0
    %1701 = vmatpush1.msra.mxu0 0.0
    %1702 = vmatprep.subr.mxu0 0.0
    %1703 = vmatpush1.msra.mxu0 0.0
    %1704 = vmatprep.subr.mxu0 0.0
    %1705 = vmatpush1.msra.mxu0 0.0
    %1706 = vmatprep.subr.mxu0 0.0
    %1707 = vmatpush1.msra.mxu0 0.0
    %1708 = vmatprep.subr.mxu0 0.0
    %1709 = vmatpush1.msra.mxu0 0.0
    %1710 = vmatprep.subr.mxu0 0.0
    %1711 = vmatpush1.msra.mxu0 0.0
    %1712 = vmatprep.mubr.f32.mxu0 0.0
    %1713 = vmatmul.mubr.f32.gmra.mrb[0].mxu0 %v1647
    %v1714 = vpop.f32.mrb[0].mxu0
    %v1715 = vadd.f32 %v502, %v1714
    %v1716 = vpop.f32.mrb[0].mxu0
    %v1717 = vadd.f32 %v506, %v1716
    %1718 = vdwg.mxu0
    %1719 = vmatprep.subr.mxu0 0.0
    %1720 = vmatpush1.msra.mxu0 %v451
    %1721 = vmatprep.subr.mxu0 0.0
    %1722 = vmatpush1.msra.mxu0 %v454
    %1723 = vmatprep.subr.mxu0 0.0
    %1724 = vmatpush1.msra.mxu0 %v457
    %1725 = vmatprep.subr.mxu0 0.0
    %1726 = vmatpush1.msra.mxu0 %v460
    %1727 = vmatprep.subr.mxu0 0.0
    %1728 = vmatpush1.msra.mxu0 %v463
    %1729 = vmatprep.subr.mxu0 0.0
    %1730 = vmatpush1.msra.mxu0 %v466
    %1731 = vmatprep.subr.mxu0 0.0
    %1732 = vmatpush1.msra.mxu0 %v469
    %1733 = vmatprep.subr.mxu0 0.0
    %1734 = vmatpush1.msra.mxu0 %v472
    %1735 = vmatprep.subr.mxu0 0.0
    %1736 = vmatpush1.msra.mxu0 %v475
    %1737 = vmatprep.subr.mxu0 0.0
    %1738 = vmatpush1.msra.mxu0 %v478
    %1739 = vmatprep.subr.mxu0 0.0
    %1740 = vmatpush1.msra.mxu0 %v481
    %1741 = vmatprep.subr.mxu0 0.0
    %1742 = vmatpush1.msra.mxu0 %v484
    %1743 = vmatprep.subr.mxu0 0.0
    %1744 = vmatpush1.msra.mxu0 %v487
    %1745 = vmatprep.subr.mxu0 0.0
    %1746 = vmatpush1.msra.mxu0 %v490
    %1747 = vmatprep.subr.mxu0 0.0
    %1748 = vmatpush1.msra.mxu0 %v493
    %1749 = vmatprep.subr.mxu0 0.0
    %1750 = vmatpush1.msra.mxu0 %v496
    %1751 = vmatprep.subr.mxu0 0.0
    %1752 = vmatpush1.msra.mxu0 0.0
    %1753 = vmatprep.subr.mxu0 0.0
    %1754 = vmatpush1.msra.mxu0 0.0
    %1755 = vmatprep.subr.mxu0 0.0
    %1756 = vmatpush1.msra.mxu0 0.0
    %1757 = vmatprep.subr.mxu0 0.0
    %1758 = vmatpush1.msra.mxu0 0.0
    %1759 = vmatprep.subr.mxu0 0.0
    %1760 = vmatpush1.msra.mxu0 0.0
    %1761 = vmatprep.subr.mxu0 0.0
    %1762 = vmatpush1.msra.mxu0 0.0
    %1763 = vmatprep.subr.mxu0 0.0
    %1764 = vmatpush1.msra.mxu0 0.0
    %1765 = vmatprep.subr.mxu0 0.0
    %1766 = vmatpush1.msra.mxu0 0.0
    %1767 = vmatprep.subr.mxu0 0.0
    %1768 = vmatpush1.msra.mxu0 0.0
    %1769 = vmatprep.subr.mxu0 0.0
    %1770 = vmatpush1.msra.mxu0 0.0
    %1771 = vmatprep.subr.mxu0 0.0
    %1772 = vmatpush1.msra.mxu0 0.0
    %1773 = vmatprep.subr.mxu0 0.0
    %1774 = vmatpush1.msra.mxu0 0.0
    %1775 = vmatprep.subr.mxu0 0.0
    %1776 = vmatpush1.msra.mxu0 0.0
    %1777 = vmatprep.subr.mxu0 0.0
    %1778 = vmatpush1.msra.mxu0 0.0
    %1779 = vmatprep.subr.mxu0 0.0
    %1780 = vmatpush1.msra.mxu0 0.0
    %1781 = vmatprep.subr.mxu0 0.0
    %1782 = vmatpush1.msra.mxu0 0.0
    %1783 = vmatprep.mubr.f32.mxu0 0.0
    %1784 = vmatmul.mubr.f32.gmra.mrb[0].mxu0 %v1647
    %v1785 = vpop.f32.mrb[0].mxu0
    %v1786 = vadd.f32 %v510, %v1785
    %v1787 = vpop.f32.mrb[0].mxu0
    %1788 = vdwg.mxu0
    %v1789 = vadd.f32 %v340, %v1715
    %v1790 = vxor.u32 %v1789, 2147483648
    %v1791 = vmul.f32 %v1790, 1.442695
    %v1792 = vpow.pop %v1791
    %v1793 = vadd.f32 %v1792, 1.0
    %v1794 = vrcp.pop %v1793
    %v1795 = vmul.f32 1.0, %v1794
    %v1796 = vadd.f32 %v342, %v1717
    %v1797 = vxor.u32 %v1796, 2147483648
    %v1798 = vmul.f32 %v1797, 1.442695
    %v1799 = vpow.pop %v1798
    %v1800 = vadd.f32 %v1799, 1.0
    %v1801 = vrcp.pop %v1800
    %v1802 = vmul.f32 1.0, %v1801
    %v1803 = vmul.f32 %v1795, %v1786
    %v1804 = vadd.f32 %v446, %v1803
    %v1805 = vtanh.pop %v1804
    %v1806 = vsub.f32 1.0, %v1802
    %v1807 = vmul.f32 %v1806, %v1805
    %v1808 = vmul.f32 %v1802, %v1647
    %v1809 = vadd.f32 %v1807, %v1808
    %v1810 = vld [vmem:[%s6] sm:$0xff]
    %v1811 = vld [vmem:[%s6 + $0x8] sm:$0xff]
    %v1812 = vld [vmem:[%s6 + $0x10] sm:$0xff]
    %v1813 = vld [vmem:[%s6 + $0x18] sm:$0xff]
    %v1814 = vld [vmem:[%s6 + $0x20] sm:$0xff]
    %v1815 = vld [vmem:[%s6 + $0x28] sm:$0xff]
    %v1816 = vld [vmem:[%s6 + $0x30] sm:$0xff]
    %v1817 = vld [vmem:[%s6 + $0x38] sm:$0xff]
    %v1818 = vld [vmem:[%s7] sm:$0xff]
    %v1819 = vld [vmem:[%s7 + $0x8] sm:$0xff]
    %v1820 = vld [vmem:[%s7 + $0x10] sm:$0xff]
    %v1821 = vld [vmem:[%s7 + $0x18] sm:$0xff]
    %v1822 = vld [vmem:[%s7 + $0x20] sm:$0xff]
    %v1823 = vld [vmem:[%s7 + $0x28] sm:$0xff]
    %v1824 = vld [vmem:[%s7 + $0x30] sm:$0xff]
    %v1825 = vld [vmem:[%s7 + $0x38] sm:$0xff]
    %1827 = vset.pattern.permute.xlu0 0
    %1828 = vperm.xlu0 %1827, %v1818
    %v1829 = vpop.permute.xlu0 %1828
    %1832 = vset.pattern.permute.xlu0 0
    %1833 = vperm.xlu0 %1832, %v1819
    %v1834 = vpop.permute.xlu0 %1833
    %1837 = vset.pattern.permute.xlu0 0
    %1838 = vperm.xlu0 %1837, %v1820
    %v1839 = vpop.permute.xlu0 %1838
    %1842 = vset.pattern.permute.xlu0 0
    %1843 = vperm.xlu0 %1842, %v1821
    %v1844 = vpop.permute.xlu0 %1843
    %1847 = vset.pattern.permute.xlu0 0
    %1848 = vperm.xlu0 %1847, %v1822
    %v1849 = vpop.permute.xlu0 %1848
    %1852 = vset.pattern.permute.xlu0 0
    %1853 = vperm.xlu0 %1852, %v1823
    %v1854 = vpop.permute.xlu0 %1853
    %1857 = vset.pattern.permute.xlu0 0
    %1858 = vperm.xlu0 %1857, %v1824
    %v1859 = vpop.permute.xlu0 %1858
    %1862 = vset.pattern.permute.xlu0 0
    %1863 = vperm.xlu0 %1862, %v1825
    %v1864 = vpop.permute.xlu0 %1863
    %vm1866 = vcmask 523264
    %v1868 = vsel %vm1866, %v1810, 0
    %v1871 = vsel %vm1866, %v1811, 0
    %v1874 = vsel %vm1866, %v1812, 0
    %v1877 = vsel %vm1866, %v1813, 0
    %v1880 = vsel %vm1866, %v1814, 0
    %v1883 = vsel %vm1866, %v1815, 0
    %v1886 = vsel %vm1866, %v1816, 0
    %v1889 = vsel %vm1866, %v1817, 0
    %1891 = vmatprep.subr.mxu0 0.0
    %1892 = vmatpush1.msra.mxu0 %v675
    %1893 = vmatprep.subr.mxu0 0.0
    %1894 = vmatpush1.msra.mxu0 %v837
    %1895 = vmatprep.subr.mxu0 0.0
    %1896 = vmatpush1.msra.mxu0 %v999
    %1897 = vmatprep.subr.mxu0 0.0
    %1898 = vmatpush1.msra.mxu0 %v1161
    %1899 = vmatprep.subr.mxu0 0.0
    %1900 = vmatpush1.msra.mxu0 %v1323
    %1901 = vmatprep.subr.mxu0 0.0
    %1902 = vmatpush1.msra.mxu0 %v1485
    %1903 = vmatprep.subr.mxu0 0.0
    %1904 = vmatpush1.msra.mxu0 %v1647
    %1905 = vmatprep.subr.mxu0 0.0
    %1906 = vmatpush1.msra.mxu0 %v1809
    %1907 = vmatprep.subr.mxu0 0.0
    %1908 = vmatpush1.msra.mxu0 0.0
    %1909 = vmatprep.subr.mxu0 0.0
    %1910 = vmatpush1.msra.mxu0 0.0
    %1911 = vmatprep.subr.mxu0 0.0
    %1912 = vmatpush1.msra.mxu0 0.0
    %1913 = vmatprep.subr.mxu0 0.0
    %1914 = vmatpush1.msra.mxu0 0.0
    %1915 = vmatprep.subr.mxu0 0.0
    %1916 = vmatpush1.msra.mxu0 0.0
    %1917 = vmatprep.subr.mxu0 0.0
    %1918 = vmatpush1.msra.mxu0 0.0
    %1919 = vmatprep.subr.mxu0 0.0
    %1920 = vmatpush1.msra.mxu0 0.0
    %1921 = vmatprep.subr.mxu0 0.0
    %1922 = vmatpush1.msra.mxu0 0.0
    %1923 = vmatprep.subr.mxu0 0.0
    %1924 = vmatpush1.msra.mxu0 0.0
    %1925 = vmatprep.subr.mxu0 0.0
    %1926 = vmatpush1.msra.mxu0 0.0
    %1927 = vmatprep.subr.mxu0 0.0
    %1928 = vmatpush1.msra.mxu0 0.0
    %1929 = vmatprep.subr.mxu0 0.0
    %1930 = vmatpush1.msra.mxu0 0.0
    %1931 = vmatprep.subr.mxu0 0.0
    %1932 = vmatpush1.msra.mxu0 0.0
    %1933 = vmatprep.subr.mxu0 0.0
    %1934 = vmatpush1.msra.mxu0 0.0
    %1935 = vmatprep.subr.mxu0 0.0
    %1936 = vmatpush1.msra.mxu0 0.0
    %1937 = vmatprep.subr.mxu0 0.0
    %1938 = vmatpush1.msra.mxu0 0.0
    %1939 = vmatprep.subr.mxu0 0.0
    %1940 = vmatpush1.msra.mxu0 0.0
    %1941 = vmatprep.subr.mxu0 0.0
    %1942 = vmatpush1.msra.mxu0 0.0
    %1943 = vmatprep.subr.mxu0 0.0
    %1944 = vmatpush1.msra.mxu0 0.0
    %1945 = vmatprep.subr.mxu0 0.0
    %1946 = vmatpush1.msra.mxu0 0.0
    %1947 = vmatprep.subr.mxu0 0.0
    %1948 = vmatpush1.msra.mxu0 0.0
    %1949 = vmatprep.subr.mxu0 0.0
    %1950 = vmatpush1.msra.mxu0 0.0
    %1951 = vmatprep.subr.mxu0 0.0
    %1952 = vmatpush1.msra.mxu0 0.0
    %1953 = vmatprep.subr.mxu0 0.0
    %1954 = vmatpush1.msra.mxu0 0.0
    %1955 = vmatprep.mubr.f32.mxu0 0.0
    %1956 = vmatmul.mubr.f32.gmra.mrb[0].mxu0 %v1868
    %v1957 = vpop.f32.mrb[0].mxu0
    %v1958 = vadd.f32 %v1829, %v1957
    %v1959 = vpop.f32.mrb[0].mxu0
    %1960 = vmatprep.mubr.f32.mxu0 0.0
    %1961 = vmatmul.mubr.f32.gmra.mrb[0].mxu0 %v1871
    %v1962 = vpop.f32.mrb[0].mxu0
    %v1963 = vadd.f32 %v1834, %v1962
    %v1964 = vpop.f32.mrb[0].mxu0
    %1965 = vmatprep.mubr.f32.mxu0 0.0
    %1966 = vmatmul.mubr.f32.gmra.mrb[0].mxu0 %v1874
    %v1967 = vpop.f32.mrb[0].mxu0
    %v1968 = vadd.f32 %v1839, %v1967
    %v1969 = vpop.f32.mrb[0].mxu0
    %1970 = vmatprep.mubr.f32.mxu0 0.0
    %1971 = vmatmul.mubr.f32.gmra.mrb[0].mxu0 %v1877
    %v1972 = vpop.f32.mrb[0].mxu0
    %v1973 = vadd.f32 %v1844, %v1972
    %v1974 = vpop.f32.mrb[0].mxu0
    %1975 = vmatprep.mubr.f32.mxu0 0.0
    %1976 = vmatmul.mubr.f32.gmra.mrb[0].mxu0 %v1880
    %v1977 = vpop.f32.mrb[0].mxu0
    %v1978 = vadd.f32 %v1849, %v1977
    %v1979 = vpop.f32.mrb[0].mxu0
    %1980 = vmatprep.mubr.f32.mxu0 0.0
    %1981 = vmatmul.mubr.f32.gmra.mrb[0].mxu0 %v1883
    %v1982 = vpop.f32.mrb[0].mxu0
    %v1983 = vadd.f32 %v1854, %v1982
    %v1984 = vpop.f32.mrb[0].mxu0
    %1985 = vmatprep.mubr.f32.mxu0 0.0
    %1986 = vmatmul.mubr.f32.gmra.mrb[0].mxu0 %v1886
    %v1987 = vpop.f32.mrb[0].mxu0
    %v1988 = vadd.f32 %v1859, %v1987
    %v1989 = vpop.f32.mrb[0].mxu0
    %1990 = vmatprep.mubr.f32.mxu0 0.0
    %1991 = vmatmul.mubr.f32.gmra.mrb[0].mxu0 %v1889
    %v1992 = vpop.f32.mrb[0].mxu0
    %v1993 = vadd.f32 %v1864, %v1992
    %v1994 = vpop.f32.mrb[0].mxu0
    %1995 = vdwg.mxu0
    %v1996 = vmax.f32 %v1958, %v1978
    %v1997 = vmax.f32 %v1963, %v1983
    %v1998 = vmax.f32 %v1968, %v1988
    %v1999 = vmax.f32 %v1973, %v1993
    %v2000 = vmax.f32 %v1996, %v1997
    %v2001 = vmax.f32 %v1998, %v1999
    %v2002 = vmax.f32 %v2000, %v2001
    %v2003 = vsub.f32 %v1958, %v2002
    %v2004 = vsub.f32 %v1963, %v2002
    %v2005 = vsub.f32 %v1968, %v2002
    %v2006 = vsub.f32 %v1973, %v2002
    %v2007 = vsub.f32 %v1978, %v2002
    %v2008 = vsub.f32 %v1983, %v2002
    %v2009 = vsub.f32 %v1988, %v2002
    %v2010 = vsub.f32 %v1993, %v2002
    %v2011 = vmul.f32 %v2003, 1.442695
    %v2012 = vpow.pop %v2011
    %v2013 = vmul.f32 %v2004, 1.442695
    %v2014 = vpow.pop %v2013
    %v2015 = vmul.f32 %v2005, 1.442695
    %v2016 = vpow.pop %v2015
    %v2017 = vmul.f32 %v2006, 1.442695
    %v2018 = vpow.pop %v2017
    %v2019 = vmul.f32 %v2007, 1.442695
    %v2020 = vpow.pop %v2019
    %v2021 = vmul.f32 %v2008, 1.442695
    %v2022 = vpow.pop %v2021
    %v2023 = vmul.f32 %v2009, 1.442695
    %v2024 = vpow.pop %v2023
    %v2025 = vmul.f32 %v2010, 1.442695
    %v2026 = vpow.pop %v2025
    %v2027 = vadd.f32 %v2012, %v2014
    %v2028 = vadd.f32 %v2027, %v2016
    %v2029 = vadd.f32 %v2028, %v2018
    %v2030 = vadd.f32 %v2029, %v2020
    %v2031 = vadd.f32 %v2030, %v2022
    %v2032 = vadd.f32 %v2031, %v2024
    %v2033 = vadd.f32 %v2032, %v2026
    %v2034 = vrcp.pop %v2033
    %v2035 = vmul.f32 %v2012, %v2034
    %v2036 = vmul.f32 %v2014, %v2034
    %v2037 = vmul.f32 %v2016, %v2034
    %v2038 = vmul.f32 %v2018, %v2034
    %v2039 = vmul.f32 %v2020, %v2034
    %v2040 = vmul.f32 %v2022, %v2034
    %v2041 = vmul.f32 %v2024, %v2034
    %v2042 = vmul.f32 %v2026, %v2034
    %v2043 = vmul.f32 %v2035, %v675
    %v2044 = vmul.f32 %v2036, %v837
    %v2045 = vmul.f32 %v2037, %v999
    %v2046 = vmul.f32 %v2038, %v1161
    %v2047 = vmul.f32 %v2039, %v1323
    %v2048 = vmul.f32 %v2040, %v1485
    %v2049 = vmul.f32 %v2041, %v1647
    %v2050 = vmul.f32 %v2042, %v1809
    %v2051 = vadd.f32 %v2043, %v2044
    %v2052 = vadd.f32 %v2051, %v2045
    %v2053 = vadd.f32 %v2052, %v2046
    %v2054 = vadd.f32 %v2053, %v2047
    %v2055 = vadd.f32 %v2054, %v2048
    %v2056 = vadd.f32 %v2055, %v2049
    %v2057 = vadd.f32 %v2056, %v2050
    %2058 = vst [vmem:[#allocation5] sm:$0xff] %v2057
    // Predicated region
    $region38: #{tpu_custom_call.1} parent=1 // pred_check
      _
    $region39: #{tpu_custom_call.1} parent=1 // pred_check_branch
      %2060 = sbr.rel (0) target = $region41
    $region40: #{tpu_custom_call.1} parent=1 // pred_region
      %s2062 = ssub.s32 128, 128
      %2063 = vsyncadd [#allocation4], %s2062
      %s2065 = sshll.u32 [#allocation5], 4
      %s2066 = int_to_ptr.vmem [resolvable:$true] %s2065
      %2068 = dma.vmem_to_hbm [thread:$0]  %s2066, 128, %s8, [#allocation4]
    $region41: #{tpu_custom_call.1} parent=1 // pred_fallthru
      _
    // Predicated region
    $region42: #{tpu_custom_call.1} parent=1 // pred_check
      _
    $region43: #{tpu_custom_call.1} parent=1 // pred_check_branch
      %2070 = sbr.rel (0) target = $region45
    $region44: #{tpu_custom_call.1} parent=1 // pred_region
      %2071 = dma.done [#allocation4], 128
    $region45: #{tpu_custom_call.1} parent=1 // pred_fallthru
      _
    %2072 = vsyncpa [#allocation3], 1
    %2073 = vsyncpa [#allocation4], 1

</llo_original>
